<compile_context>
chip_gen: v5e
topology: v5e:2x2
jax: 0.10.0
libtpu: 0.0.40
codegen_flags: <defaults>
</compile_context>

<pallas_src>
import functools
import math

import jax
import jax.numpy as jnp
from jax.experimental import pallas as pl
from jax.experimental.pallas import tpu as pltpu


# ------------------------------------------------------------------
# Fused kernel: edge projection + TransC convolution + AvgPool2d
# ------------------------------------------------------------------
def fused_graph_kernel(x_ref, adj_ref, e_ref, wqkvr_ref, wedge_ref,
                       wbeta_ref, pool_ref, o_ref, *, d_model):
    D = d_model
    x = x_ref[...]                                               # [N, F]
    N = x.shape[0]

    # Packed Q/K/V/R projection: one lane-dense [N, F] x [F, 4D] MXU matmul.
    qkvr = jnp.dot(x, wqkvr_ref[...], preferred_element_type=jnp.float32)
    q = qkvr[:, 0 * D:1 * D]
    k = qkvr[:, 1 * D:2 * D]
    v = qkvr[:, 2 * D:3 * D]
    r = qkvr[:, 3 * D:4 * D]

    # Folded edge projection: single [N*N, edge_dim] x [edge_dim, D] matmul.
    eb = jnp.dot(e_ref[...], wedge_ref[...],
                 preferred_element_type=jnp.float32).reshape(N, N, D)

    # Edge-biased attention scores: scores[i, j] = q_i . (k_j + e_ij) / sqrt(D)
    kb = k[None, :, :] + eb                                      # [N, N, D]
    scores = jnp.einsum('nqd,nmd->nqm', q[:, None, :], kb,
                        preferred_element_type=jnp.float32)[:, 0, :]
    scores = scores * (1.0 / math.sqrt(D))

    # Masked softmax over neighbours (mask computed once, reused).
    mask = adj_ref[...] > 0
    scores = jnp.where(mask, scores, -1e30)
    m = jnp.max(scores, axis=-1, keepdims=True)
    p = jnp.where(mask, jnp.exp(scores - m), 0.0)
    denom = jnp.maximum(jnp.sum(p, axis=-1, keepdims=True), 1e-30)  # isolated-node guard
    alpha = p * pl.reciprocal(denom, approx=True)                # [N, N]

    # Aggregation fused with the edge term: agg_i = alpha_i @ (v + eb[i]).
    vb = v[None, :, :] + eb                                      # [N, N, D]
    agg = jnp.einsum('nqm,nmd->nqd', alpha[:, None, :], vb,
                     preferred_element_type=jnp.float32)[:, 0, :]

    # Folded beta gate: sigmoid(r . (w1 + w3) + agg . (w2 - w3)).
    wb = wbeta_ref[...]                                          # [2, D]
    logit = jnp.sum(r * wb[0:1, :] + agg * wb[1:2, :], axis=-1, keepdims=True)
    beta = jax.nn.sigmoid(logit)                                 # [N, 1]
    out = beta * r + (1.0 - beta) * agg + x                      # beta gate + more_skip

    # AvgPool2d((num_object, 1)) as a pooling-matrix matmul -> [G, D].
    o_ref[...] = jnp.dot(pool_ref[...], out, preferred_element_type=jnp.float32)


# ------------------------------------------------------------------
# Wrapper
# ------------------------------------------------------------------
def graph_transformer_forward(x, adj, edge_attr, params,
                              batch_size, n_node, num_object):
    N, F = x.shape
    D = params["wq"].shape[1]
    edge_dim = edge_attr.shape[-1]
    assert F == D, "more_skip residual requires node_feat_dim == d_model"
    assert n_node % num_object == 0
    n_frames = n_node // num_object
    G = batch_size * n_frames            # pooled rows (N // num_object)

    # Fold the two edge linears (no bias / nonlinearity between them).
    w_edge = jnp.dot(params["wpe"], params["we"])                  # [edge_dim, D]

    # Pack Q/K/V/R into one lane-dense [F, 4D] weight.
    w_qkvr = jnp.concatenate(
        [params["wq"], params["wk"], params["wv"], params["wr"]], axis=1)

    # Fold wbeta [3D, 1] over cat([r, agg, r-agg]) into two [D] vectors.
    wb = params["wbeta"][:, 0]
    w_beta2 = jnp.stack(
        [wb[0:D] + wb[2 * D:3 * D], wb[D:2 * D] - wb[2 * D:3 * D]], axis=0)  # [2, D]

    # AvgPool2d((num_object, 1)) == mean over consecutive groups of num_object
    # nodes -> pooling matrix [G, N].
    group = jnp.arange(N) // num_object
    pool_mat = (jnp.arange(G)[:, None] == group[None, :]).astype(jnp.float32)
    pool_mat = pool_mat / jnp.float32(num_object)

    edge_flat = edge_attr.reshape(N * N, edge_dim)

    pooled = pl.pallas_call(
        functools.partial(fused_graph_kernel, d_model=D),
        out_shape=jax.ShapeDtypeStruct((G, D), jnp.float32),
        grid=(1,),
        in_specs=[
            pl.BlockSpec((N, F), lambda i: (0, 0)),
            pl.BlockSpec((N, N), lambda i: (0, 0)),
            pl.BlockSpec((N * N, edge_dim), lambda i: (0, 0)),
            pl.BlockSpec((F, 4 * D), lambda i: (0, 0)),
            pl.BlockSpec((edge_dim, D), lambda i: (0, 0)),
            pl.BlockSpec((2, D), lambda i: (0, 0)),
            pl.BlockSpec((G, N), lambda i: (0, 0)),
        ],
        out_specs=pl.BlockSpec((G, D), lambda i: (0, 0)),
    )(x, adj, edge_flat, w_qkvr, w_edge, w_beta2, pool_mat)

    # [batch, n_frames, d_model] — visual features fed to CaptionGenerator.
    return pooled.reshape(batch_size, n_frames, D)


# ------------------------------------------------------------------
# Parameter / input construction and run
# ------------------------------------------------------------------
def init_params(key, node_feat_dim, d_model, edge_dim, project_edge_dim):
    ks = jax.random.split(key, 7)
    s = 0.1
    return {
        "wpe": s * jax.random.normal(ks[0], (edge_dim, project_edge_dim), jnp.float32),
        "we": s * jax.random.normal(ks[1], (project_edge_dim, d_model), jnp.float32),
        "wq": s * jax.random.normal(ks[2], (node_feat_dim, d_model), jnp.float32),
        "wk": s * jax.random.normal(ks[3], (node_feat_dim, d_model), jnp.float32),
        "wv": s * jax.random.normal(ks[4], (node_feat_dim, d_model), jnp.float32),
        "wr": s * jax.random.normal(ks[5], (node_feat_dim, d_model), jnp.float32),
        "wbeta": s * jax.random.normal(ks[6], (3 * d_model, 1), jnp.float32),
    }


if __name__ == "__main__":
    # small config consistent with the module's args
    batch_size = 2
    n_node = 8          # nodes per sample = n_frames * num_object
    num_object = 4
    node_feat_dim = 32
    d_model = 32
    edge_dim = 8
    project_edge_dim = 16

    N = batch_size * n_node   # total nodes in the batched graph

    key = jax.random.PRNGKey(0)
    k_x, k_e, k_p = jax.random.split(key, 3)

    x = jax.random.normal(k_x, (N, node_feat_dim), jnp.float32)

    # block-diagonal adjacency: nodes attend only within their own sample's graph
    sample_id = jnp.arange(N) // n_node
    adj = (sample_id[:, None] == sample_id[None, :]).astype(jnp.float32)

    # dense edge features, zeroed where there is no edge
    edge_attr = jax.random.normal(k_e, (N, N, edge_dim), jnp.float32)
    edge_attr = edge_attr * adj[:, :, None]

    params = init_params(k_p, node_feat_dim, d_model, edge_dim, project_edge_dim)

    out = graph_transformer_forward(x, adj, edge_attr, params,
                                    batch_size, n_node, num_object)
    out = jax.block_until_ready(out)
    assert out.shape == (batch_size, n_node // num_object, d_model)
    assert jnp.all(jnp.isfinite(out))
    print("KERNEL_OK")
</pallas_src>

<mosaic_0001>
module attributes {stable_mosaic.version = 11 : i64} {
  func.func @fused_graph_kernel(%arg0: i32, %arg1: memref<16x32xf32, #tpu.memory_space<vmem>>, %arg2: memref<16x16xf32, #tpu.memory_space<vmem>>, %arg3: memref<256x8xf32, #tpu.memory_space<vmem>>, %arg4: memref<32x128xf32, #tpu.memory_space<vmem>>, %arg5: memref<8x32xf32, #tpu.memory_space<vmem>>, %arg6: memref<2x32xf32, #tpu.memory_space<vmem>>, %arg7: memref<4x16xf32, #tpu.memory_space<vmem>>, %arg8: memref<4x32xf32, #tpu.memory_space<vmem>>) attributes {dimension_semantics = [#tpu.dimension_semantics<arbitrary>], iteration_bounds = array<i64: 1>, scalar_prefetch = 0 : i64, scratch_operands = 0 : i64, tpu.core_type = #tpu.core_type<tc>, window_params = [{pipeline_mode = #tpu.pipeline_mode<synchronous>, transform_indices = @transform_0, window_bounds = array<i64: 16, 32>}, {pipeline_mode = #tpu.pipeline_mode<synchronous>, transform_indices = @transform_1, window_bounds = array<i64: 16, 16>}, {pipeline_mode = #tpu.pipeline_mode<synchronous>, transform_indices = @transform_2, window_bounds = array<i64: 256, 8>}, {pipeline_mode = #tpu.pipeline_mode<synchronous>, transform_indices = @transform_3, window_bounds = array<i64: 32, 128>}, {pipeline_mode = #tpu.pipeline_mode<synchronous>, transform_indices = @transform_4, window_bounds = array<i64: 8, 32>}, {pipeline_mode = #tpu.pipeline_mode<synchronous>, transform_indices = @transform_5, window_bounds = array<i64: 2, 32>}, {pipeline_mode = #tpu.pipeline_mode<synchronous>, transform_indices = @transform_6, window_bounds = array<i64: 4, 16>}, {pipeline_mode = #tpu.pipeline_mode<synchronous>, transform_indices = @transform_7, window_bounds = array<i64: 4, 32>}]} {
    %c0 = arith.constant 0 : index
    %c0_0 = arith.constant 0 : index
    %0 = vector.load %arg1[%c0, %c0_0] : memref<16x32xf32, #tpu.memory_space<vmem>>, vector<16x32xf32>
    %c0_1 = arith.constant 0 : index
    %c0_2 = arith.constant 0 : index
    %1 = vector.load %arg4[%c0_1, %c0_2] : memref<32x128xf32, #tpu.memory_space<vmem>>, vector<32x128xf32>
    %cst = arith.constant dense<0.000000e+00> : vector<16x128xf32>
    %2 = tpu.matmul %0, %1, %cst {dimension_numbers = #tpu.dot_dimension_numbers<[1], [0], [0], [1], [0, 0, 1, 1], [], []>} : vector<16x32xf32>, vector<32x128xf32>, vector<16x128xf32> -> vector<16x128xf32>
    %3 = vector.extract_strided_slice %2 {offsets = [0, 0], sizes = [16, 32], strides = [1, 1]} : vector<16x128xf32> to vector<16x32xf32>
    %4 = vector.extract_strided_slice %2 {offsets = [0, 32], sizes = [16, 32], strides = [1, 1]} : vector<16x128xf32> to vector<16x32xf32>
    %5 = vector.extract_strided_slice %2 {offsets = [0, 64], sizes = [16, 32], strides = [1, 1]} : vector<16x128xf32> to vector<16x32xf32>
    %6 = vector.extract_strided_slice %2 {offsets = [0, 96], sizes = [16, 32], strides = [1, 1]} : vector<16x128xf32> to vector<16x32xf32>
    %c0_3 = arith.constant 0 : index
    %c0_4 = arith.constant 0 : index
    %7 = vector.load %arg3[%c0_3, %c0_4] : memref<256x8xf32, #tpu.memory_space<vmem>>, vector<256x8xf32>
    %c0_5 = arith.constant 0 : index
    %c0_6 = arith.constant 0 : index
    %8 = vector.load %arg5[%c0_5, %c0_6] : memref<8x32xf32, #tpu.memory_space<vmem>>, vector<8x32xf32>
    %cst_7 = arith.constant dense<0.000000e+00> : vector<256x32xf32>
    %9 = tpu.matmul %7, %8, %cst_7 {dimension_numbers = #tpu.dot_dimension_numbers<[1], [0], [0], [1], [0, 0, 1, 1], [], []>} : vector<256x8xf32>, vector<8x32xf32>, vector<256x32xf32> -> vector<256x32xf32>
    %10 = vector.shape_cast %9 : vector<256x32xf32> to vector<16x16x32xf32>
    %11 = vector.shape_cast %4 : vector<16x32xf32> to vector<1x16x32xf32>
    %12 = vector.broadcast %11 : vector<1x16x32xf32> to vector<16x16x32xf32>
    %13 = arith.addf %12, %10 : vector<16x16x32xf32>
    %14 = vector.shape_cast %3 : vector<16x32xf32> to vector<16x1x32xf32>
    "tpu.trace_start"() <{level = 10 : i32, message = "nqd,nmd->nqm"}> : () -> ()
    %cst_8 = arith.constant dense<0.000000e+00> : vector<16x1x16xf32>
    %15 = tpu.matmul %14, %13, %cst_8 {dimension_numbers = #tpu.dot_dimension_numbers<[2], [2], [1], [1], [0, 0, 0, 1, 1, 1], [0], [0]>} : vector<16x1x32xf32>, vector<16x16x32xf32>, vector<16x1x16xf32> -> vector<16x1x16xf32>
    "tpu.trace_stop"() : () -> ()
    %16 = vector.shape_cast %15 : vector<16x1x16xf32> to vector<16x16xf32>
    %cst_9 = arith.constant 0.176776692 : f32
    %17 = vector.broadcast %cst_9 : f32 to vector<16x16xf32>
    %18 = arith.mulf %16, %17 : vector<16x16xf32>
    %c0_10 = arith.constant 0 : index
    %c0_11 = arith.constant 0 : index
    %19 = vector.load %arg2[%c0_10, %c0_11] : memref<16x16xf32, #tpu.memory_space<vmem>>, vector<16x16xf32>
    %cst_12 = arith.constant 0.000000e+00 : f32
    %20 = vector.broadcast %cst_12 : f32 to vector<16x16xf32>
    %21 = arith.cmpf ogt, %19, %20 : vector<16x16xf32>
    %cst_13 = arith.constant -1.000000e+30 : f32
    %22 = vector.broadcast %cst_13 : f32 to vector<16x16xf32>
    %23 = arith.select %21, %18, %22 : vector<16x16xi1>, vector<16x16xf32>
    %cst_14 = arith.constant dense<0xFF800000> : vector<16xf32>
    %24 = vector.multi_reduction <maximumf>, %23, %cst_14 [1] : vector<16x16xf32> to vector<16xf32>
    %25 = vector.shape_cast %24 : vector<16xf32> to vector<16x1xf32>
    %26 = vector.broadcast %25 : vector<16x1xf32> to vector<16x16xf32>
    %27 = arith.subf %23, %26 : vector<16x16xf32>
    %28 = math.exp %27 : vector<16x16xf32>
    %cst_15 = arith.constant 0.000000e+00 : f32
    %29 = vector.broadcast %cst_15 : f32 to vector<16x16xf32>
    %30 = arith.select %21, %28, %29 : vector<16x16xi1>, vector<16x16xf32>
    %cst_16 = arith.constant dense<0.000000e+00> : vector<16xf32>
    %31 = vector.multi_reduction <add>, %30, %cst_16 [1] : vector<16x16xf32> to vector<16xf32>
    %32 = vector.shape_cast %31 : vector<16xf32> to vector<16x1xf32>
    %cst_17 = arith.constant 1.000000e-30 : f32
    %33 = vector.broadcast %cst_17 : f32 to vector<16x1xf32>
    %34 = arith.maximumf %32, %33 : vector<16x1xf32>
    %35 = tpu.reciprocal %34 {approx = true} : vector<16x1xf32> -> vector<16x1xf32>
    %36 = vector.broadcast %35 : vector<16x1xf32> to vector<16x16xf32>
    %37 = arith.mulf %30, %36 : vector<16x16xf32>
    %38 = vector.shape_cast %5 : vector<16x32xf32> to vector<1x16x32xf32>
    %39 = vector.broadcast %38 : vector<1x16x32xf32> to vector<16x16x32xf32>
    %40 = arith.addf %39, %10 : vector<16x16x32xf32>
    %41 = vector.shape_cast %37 : vector<16x16xf32> to vector<16x1x16xf32>
    "tpu.trace_start"() <{level = 10 : i32, message = "nqm,nmd->nqd"}> : () -> ()
    %cst_18 = arith.constant dense<0.000000e+00> : vector<16x1x32xf32>
    %42 = tpu.matmul %41, %40, %cst_18 {dimension_numbers = #tpu.dot_dimension_numbers<[2], [1], [1], [2], [0, 0, 0, 1, 1, 2], [0], [0]>} : vector<16x1x16xf32>, vector<16x16x32xf32>, vector<16x1x32xf32> -> vector<16x1x32xf32>
    "tpu.trace_stop"() : () -> ()
    %43 = vector.shape_cast %42 : vector<16x1x32xf32> to vector<16x32xf32>
    %c0_19 = arith.constant 0 : index
    %c0_20 = arith.constant 0 : index
    %44 = vector.load %arg6[%c0_19, %c0_20] : memref<2x32xf32, #tpu.memory_space<vmem>>, vector<2x32xf32>
    %45 = vector.extract_strided_slice %44 {offsets = [0, 0], sizes = [1, 32], strides = [1, 1]} : vector<2x32xf32> to vector<1x32xf32>
    %46 = vector.broadcast %45 : vector<1x32xf32> to vector<16x32xf32>
    %47 = arith.mulf %6, %46 : vector<16x32xf32>
    %48 = vector.extract_strided_slice %44 {offsets = [1, 0], sizes = [1, 32], strides = [1, 1]} : vector<2x32xf32> to vector<1x32xf32>
    %49 = vector.broadcast %48 : vector<1x32xf32> to vector<16x32xf32>
    %50 = arith.mulf %43, %49 : vector<16x32xf32>
    %51 = arith.addf %47, %50 : vector<16x32xf32>
    %cst_21 = arith.constant dense<0.000000e+00> : vector<16xf32>
    %52 = vector.multi_reduction <add>, %51, %cst_21 [1] : vector<16x32xf32> to vector<16xf32>
    %53 = vector.shape_cast %52 : vector<16xf32> to vector<16x1xf32>
    %54 = arith.negf %53 : vector<16x1xf32>
    %55 = math.exp %54 : vector<16x1xf32>
    %cst_22 = arith.constant 1.000000e+00 : f32
    %56 = vector.broadcast %cst_22 : f32 to vector<16x1xf32>
    %57 = arith.addf %56, %55 : vector<16x1xf32>
    %58 = arith.divf %56, %57 : vector<16x1xf32>
    %59 = vector.broadcast %58 : vector<16x1xf32> to vector<16x32xf32>
    %60 = arith.mulf %59, %6 : vector<16x32xf32>
    %cst_23 = arith.constant 1.000000e+00 : f32
    %61 = vector.broadcast %cst_23 : f32 to vector<16x1xf32>
    %62 = arith.subf %61, %58 : vector<16x1xf32>
    %63 = vector.broadcast %62 : vector<16x1xf32> to vector<16x32xf32>
    %64 = arith.mulf %63, %43 : vector<16x32xf32>
    %65 = arith.addf %60, %64 : vector<16x32xf32>
    %66 = arith.addf %65, %0 : vector<16x32xf32>
    %c0_24 = arith.constant 0 : index
    %c0_25 = arith.constant 0 : index
    %67 = vector.load %arg7[%c0_24, %c0_25] : memref<4x16xf32, #tpu.memory_space<vmem>>, vector<4x16xf32>
    %cst_26 = arith.constant dense<0.000000e+00> : vector<4x32xf32>
    %68 = tpu.matmul %67, %66, %cst_26 {dimension_numbers = #tpu.dot_dimension_numbers<[1], [0], [0], [1], [0, 0, 1, 1], [], []>} : vector<4x16xf32>, vector<16x32xf32>, vector<4x32xf32> -> vector<4x32xf32>
    %c0_27 = arith.constant 0 : index
    %c0_28 = arith.constant 0 : index
    %69 = vector.load %arg8[%c0_27, %c0_28] : memref<4x32xf32, #tpu.memory_space<vmem>>, vector<4x32xf32>
    tpu.vector_store %arg8[%c0_27, %c0_28], %68 {strides = array<i32>} : memref<4x32xf32, #tpu.memory_space<vmem>>, vector<4x32xf32>,
    return
  }
  func.func @transform_0(%arg0: i32) -> (i32, i32) {
    %c0_i32 = arith.constant 0 : i32
    %c0_i32_0 = arith.constant 0 : i32
    %c0_i32_1 = arith.constant 0 : i32
    return %c0_i32, %c0_i32_0 : i32, i32
  }
  func.func @transform_1(%arg0: i32) -> (i32, i32) {
    %c0_i32 = arith.constant 0 : i32
    %c0_i32_0 = arith.constant 0 : i32
    %c0_i32_1 = arith.constant 0 : i32
    return %c0_i32, %c0_i32_0 : i32, i32
  }
  func.func @transform_2(%arg0: i32) -> (i32, i32) {
    %c0_i32 = arith.constant 0 : i32
    %c0_i32_0 = arith.constant 0 : i32
    %c0_i32_1 = arith.constant 0 : i32
    return %c0_i32, %c0_i32_0 : i32, i32
  }
  func.func @transform_3(%arg0: i32) -> (i32, i32) {
    %c0_i32 = arith.constant 0 : i32
    %c0_i32_0 = arith.constant 0 : i32
    %c0_i32_1 = arith.constant 0 : i32
    return %c0_i32, %c0_i32_0 : i32, i32
  }
  func.func @transform_4(%arg0: i32) -> (i32, i32) {
    %c0_i32 = arith.constant 0 : i32
    %c0_i32_0 = arith.constant 0 : i32
    %c0_i32_1 = arith.constant 0 : i32
    return %c0_i32, %c0_i32_0 : i32, i32
  }
  func.func @transform_5(%arg0: i32) -> (i32, i32) {
    %c0_i32 = arith.constant 0 : i32
    %c0_i32_0 = arith.constant 0 : i32
    %c0_i32_1 = arith.constant 0 : i32
    return %c0_i32, %c0_i32_0 : i32, i32
  }
  func.func @transform_6(%arg0: i32) -> (i32, i32) {
    %c0_i32 = arith.constant 0 : i32
    %c0_i32_0 = arith.constant 0 : i32
    %c0_i32_1 = arith.constant 0 : i32
    return %c0_i32, %c0_i32_0 : i32, i32
  }
  func.func @transform_7(%arg0: i32) -> (i32, i32) {
    %c0_i32 = arith.constant 0 : i32
    %c0_i32_0 = arith.constant 0 : i32
    %c0_i32_1 = arith.constant 0 : i32
    return %c0_i32, %c0_i32_0 : i32, i32
  }
}

</mosaic_0001>

<llo_original>
// kernel: tpu_custom_call.1
$region0: #{tpu_custom_call.1}
  #allocation0 [shape = 'u32[]', space=smem, size = 0x4, offset = 0x4, fixed_abs, tag = 'smem constant byte address 0x4 - core index']
  #allocation1 [shape = 'u32[72,128]{1,0:T(1,128)}', space=vmem, size = 0x9000, scoped, tag = 'internal scratch']
  %s0 = inlined_call_operand.vmem [shape: f32[16,32], index: 0, kind: input, shape index: {}]
  %s1 = inlined_call_operand.vmem [shape: f32[16,16], index: 1, kind: input, shape index: {}]
  %s2 = inlined_call_operand.vmem [shape: f32[256,8], index: 2, kind: input, shape index: {}]
  %s3 = inlined_call_operand.vmem [shape: f32[32,128], index: 3, kind: input, shape index: {}]
  %s4 = inlined_call_operand.vmem [shape: f32[8,32], index: 4, kind: input, shape index: {}]
  %s5 = inlined_call_operand.vmem [shape: f32[2,32], index: 5, kind: input, shape index: {}]
  %s6 = inlined_call_operand.vmem [shape: f32[4,16], index: 6, kind: input, shape index: {}]
  %s7 = inlined_call_operand.hbm [shape: f32[4,32], index: 7, kind: output, shape index: {}]
  %s8 = sld [smem:[#allocation0]]
  $region38: #{tpu_custom_call.1} parent=0
    _
  %s10 = ssub.s32 1, %s8
  %s11 = scalar_select 0, %s10, %s8
  $region1: #{tpu_custom_call.1} parent=0
    #allocation2 [shape = 'u8[2048]{0}', space=vmem, size = 0x800, scoped, tag = 'output window, operand 0, single buffered']
    #allocation3 [shape = 's32[1]{0}', space=sflag, size = 0x4, scoped, tag = 'scoped memory for tpu_custom_call.1']
    %12 = vsyncpa [#allocation3], 0
    // Predicated region
    $region2: #{tpu_custom_call.1} parent=1 // pred_check
      _
    $region3: #{tpu_custom_call.1} parent=1 // pred_check_branch
      %14 = sbr.rel (0) target = $region5
    $region4: #{tpu_custom_call.1} parent=1 // pred_region
      _
    $region5: #{tpu_custom_call.1} parent=1 // pred_fallthru
      _
    // Predicated region
    $region6: #{tpu_custom_call.1} parent=1 // pred_check
      _
    $region7: #{tpu_custom_call.1} parent=1 // pred_check_branch
      %16 = sbr.rel (0) target = $region9
    $region8: #{tpu_custom_call.1} parent=1 // pred_region
      _
    $region9: #{tpu_custom_call.1} parent=1 // pred_fallthru
      _
    // Predicated region
    $region10: #{tpu_custom_call.1} parent=1 // pred_check
      _
    $region11: #{tpu_custom_call.1} parent=1 // pred_check_branch
      %18 = sbr.rel (0) target = $region13
    $region12: #{tpu_custom_call.1} parent=1 // pred_region
      _
    $region13: #{tpu_custom_call.1} parent=1 // pred_fallthru
      _
    // Predicated region
    $region14: #{tpu_custom_call.1} parent=1 // pred_check
      _
    $region15: #{tpu_custom_call.1} parent=1 // pred_check_branch
      %20 = sbr.rel (0) target = $region17
    $region16: #{tpu_custom_call.1} parent=1 // pred_region
      _
    $region17: #{tpu_custom_call.1} parent=1 // pred_fallthru
      _
    // Predicated region
    $region18: #{tpu_custom_call.1} parent=1 // pred_check
      _
    $region19: #{tpu_custom_call.1} parent=1 // pred_check_branch
      %22 = sbr.rel (0) target = $region21
    $region20: #{tpu_custom_call.1} parent=1 // pred_region
      _
    $region21: #{tpu_custom_call.1} parent=1 // pred_fallthru
      _
    // Predicated region
    $region22: #{tpu_custom_call.1} parent=1 // pred_check
      _
    $region23: #{tpu_custom_call.1} parent=1 // pred_check_branch
      %24 = sbr.rel (0) target = $region25
    $region24: #{tpu_custom_call.1} parent=1 // pred_region
      _
    $region25: #{tpu_custom_call.1} parent=1 // pred_fallthru
      _
    // Predicated region
    $region26: #{tpu_custom_call.1} parent=1 // pred_check
      _
    $region27: #{tpu_custom_call.1} parent=1 // pred_check_branch
      %26 = sbr.rel (0) target = $region29
    $region28: #{tpu_custom_call.1} parent=1 // pred_region
      _
    $region29: #{tpu_custom_call.1} parent=1 // pred_fallthru
      _
    %v27 = vld [vmem:[%s0] sm:$0xff]
    %v28 = vld [vmem:[%s0 + $0x8] sm:$0xff]
    %v29 = vld [vmem:[%s3] sm:$0xff]
    %v30 = vld [vmem:[%s3 + $0x8] sm:$0xff]
    %v31 = vld [vmem:[%s3 + $0x10] sm:$0xff]
    %v32 = vld [vmem:[%s3 + $0x18] sm:$0xff]
    %vm33 = vcmask 261120
    %v35 = vsel %vm33, %v27, 0
    %v38 = vsel %vm33, %v28, 0
    %40 = vmatpush.msra.mxu0 0.0
    %41 = vmatpush.msra.mxu0 0.0
    %42 = vmatpush.msra.mxu0 0.0
    %43 = vmatpush.msra.mxu0 0.0
    %44 = vmatpush.msra.mxu0 0.0
    %45 = vmatpush.msra.mxu0 0.0
    %46 = vmatpush.msra.mxu0 0.0
    %47 = vmatpush.msra.mxu0 0.0
    %48 = vmatpush.msra.mxu0 0.0
    %49 = vmatpush.msra.mxu0 0.0
    %50 = vmatpush.msra.mxu0 0.0
    %51 = vmatpush.msra.mxu0 0.0
    %52 = vmatpush.msra.mxu0 %v32
    %53 = vmatpush.msra.mxu0 %v31
    %54 = vmatpush.msra.mxu0 %v30
    %55 = vmatpush.msra.mxu0 %v29
    %56 = vmatmul.f32.gmra.mxu0 %v35
    %v57 = vpop.f32.mrf.mxu0
    %v58 = vadd.f32 0.0, %v57
    %59 = vmatmul.f32.gmra.mxu0 %v38
    %v60 = vpop.f32.mrf.mxu0
    %v61 = vadd.f32 0.0, %v60
    %62 = vdwg.mxu0
    %v63 = vld [vmem:[%s2] sm:$0xff]
    %v64 = vld [vmem:[%s2 + $0x8] sm:$0xff]
    %v65 = vld [vmem:[%s2 + $0x10] sm:$0xff]
    %v66 = vld [vmem:[%s2 + $0x18] sm:$0xff]
    %v67 = vld [vmem:[%s2 + $0x20] sm:$0xff]
    %v68 = vld [vmem:[%s2 + $0x28] sm:$0xff]
    %v69 = vld [vmem:[%s2 + $0x30] sm:$0xff]
    %v70 = vld [vmem:[%s2 + $0x38] sm:$0xff]
    %v71 = vld [vmem:[%s2 + $0x40] sm:$0xff]
    %v72 = vld [vmem:[%s2 + $0x48] sm:$0xff]
    %v73 = vld [vmem:[%s2 + $0x50] sm:$0xff]
    %v74 = vld [vmem:[%s2 + $0x58] sm:$0xff]
    %v75 = vld [vmem:[%s2 + $0x60] sm:$0xff]
    %v76 = vld [vmem:[%s2 + $0x68] sm:$0xff]
    %v77 = vld [vmem:[%s2 + $0x70] sm:$0xff]
    %v78 = vld [vmem:[%s2 + $0x78] sm:$0xff]
    %v79 = vld [vmem:[%s2 + $0x80] sm:$0xff]
    %v80 = vld [vmem:[%s2 + $0x88] sm:$0xff]
    %v81 = vld [vmem:[%s2 + $0x90] sm:$0xff]
    %v82 = vld [vmem:[%s2 + $0x98] sm:$0xff]
    %v83 = vld [vmem:[%s2 + $0xa0] sm:$0xff]
    %v84 = vld [vmem:[%s2 + $0xa8] sm:$0xff]
    %v85 = vld [vmem:[%s2 + $0xb0] sm:$0xff]
    %v86 = vld [vmem:[%s2 + $0xb8] sm:$0xff]
    %v87 = vld [vmem:[%s2 + $0xc0] sm:$0xff]
    %v88 = vld [vmem:[%s2 + $0xc8] sm:$0xff]
    %v89 = vld [vmem:[%s2 + $0xd0] sm:$0xff]
    %v90 = vld [vmem:[%s2 + $0xd8] sm:$0xff]
    %v91 = vld [vmem:[%s2 + $0xe0] sm:$0xff]
    %v92 = vld [vmem:[%s2 + $0xe8] sm:$0xff]
    %v93 = vld [vmem:[%s2 + $0xf0] sm:$0xff]
    %v94 = vld [vmem:[%s2 + $0xf8] sm:$0xff]
    %v95 = vld [vmem:[%s4] sm:$0xff]
    %vm96 = vcmask 64512
    %v98 = vsel %vm96, %v63, 0
    %v101 = vsel %vm96, %v64, 0
    %v104 = vsel %vm96, %v65, 0
    %v107 = vsel %vm96, %v66, 0
    %v110 = vsel %vm96, %v67, 0
    %v113 = vsel %vm96, %v68, 0
    %v116 = vsel %vm96, %v69, 0
    %v119 = vsel %vm96, %v70, 0
    %v122 = vsel %vm96, %v71, 0
    %v125 = vsel %vm96, %v72, 0
    %v128 = vsel %vm96, %v73, 0
    %v131 = vsel %vm96, %v74, 0
    %v134 = vsel %vm96, %v75, 0
    %v137 = vsel %vm96, %v76, 0
    %v140 = vsel %vm96, %v77, 0
    %v143 = vsel %vm96, %v78, 0
    %v146 = vsel %vm96, %v79, 0
    %v149 = vsel %vm96, %v80, 0
    %v152 = vsel %vm96, %v81, 0
    %v155 = vsel %vm96, %v82, 0
    %v158 = vsel %vm96, %v83, 0
    %v161 = vsel %vm96, %v84, 0
    %v164 = vsel %vm96, %v85, 0
    %v167 = vsel %vm96, %v86, 0
    %v170 = vsel %vm96, %v87, 0
    %v173 = vsel %vm96, %v88, 0
    %v176 = vsel %vm96, %v89, 0
    %v179 = vsel %vm96, %v90, 0
    %v182 = vsel %vm96, %v91, 0
    %v185 = vsel %vm96, %v92, 0
    %v188 = vsel %vm96, %v93, 0
    %v191 = vsel %vm96, %v94, 0
    %193 = vmatpush.msra.mxu0 0.0
    %194 = vmatpush.msra.mxu0 0.0
    %195 = vmatpush.msra.mxu0 0.0
    %196 = vmatpush.msra.mxu0 0.0
    %197 = vmatpush.msra.mxu0 0.0
    %198 = vmatpush.msra.mxu0 0.0
    %199 = vmatpush.msra.mxu0 0.0
    %200 = vmatpush.msra.mxu0 0.0
    %201 = vmatpush.msra.mxu0 0.0
    %202 = vmatpush.msra.mxu0 0.0
    %203 = vmatpush.msra.mxu0 0.0
    %204 = vmatpush.msra.mxu0 0.0
    %205 = vmatpush.msra.mxu0 0.0
    %206 = vmatpush.msra.mxu0 0.0
    %207 = vmatpush.msra.mxu0 0.0
    %208 = vmatpush.msra.mxu0 %v95
    %209 = vmatmul.f32.gmra.mxu0 %v98
    %v210 = vpop.f32.mrf.mxu0
    %v211 = vadd.f32 0.0, %v210
    %212 = vmatmul.f32.gmra.mxu0 %v101
    %v213 = vpop.f32.mrf.mxu0
    %v214 = vadd.f32 0.0, %v213
    %215 = vmatmul.f32.gmra.mxu0 %v104
    %v216 = vpop.f32.mrf.mxu0
    %v217 = vadd.f32 0.0, %v216
    %218 = vmatmul.f32.gmra.mxu0 %v107
    %v219 = vpop.f32.mrf.mxu0
    %v220 = vadd.f32 0.0, %v219
    %221 = vmatmul.f32.gmra.mxu0 %v110
    %v222 = vpop.f32.mrf.mxu0
    %v223 = vadd.f32 0.0, %v222
    %224 = vmatmul.f32.gmra.mxu0 %v113
    %v225 = vpop.f32.mrf.mxu0
    %v226 = vadd.f32 0.0, %v225
    %227 = vmatmul.f32.gmra.mxu0 %v116
    %v228 = vpop.f32.mrf.mxu0
    %v229 = vadd.f32 0.0, %v228
    %230 = vmatmul.f32.gmra.mxu0 %v119
    %v231 = vpop.f32.mrf.mxu0
    %v232 = vadd.f32 0.0, %v231
    %233 = vmatmul.f32.gmra.mxu0 %v122
    %v234 = vpop.f32.mrf.mxu0
    %v235 = vadd.f32 0.0, %v234
    %236 = vmatmul.f32.gmra.mxu0 %v125
    %v237 = vpop.f32.mrf.mxu0
    %v238 = vadd.f32 0.0, %v237
    %239 = vmatmul.f32.gmra.mxu0 %v128
    %v240 = vpop.f32.mrf.mxu0
    %v241 = vadd.f32 0.0, %v240
    %242 = vmatmul.f32.gmra.mxu0 %v131
    %v243 = vpop.f32.mrf.mxu0
    %v244 = vadd.f32 0.0, %v243
    %245 = vmatmul.f32.gmra.mxu0 %v134
    %v246 = vpop.f32.mrf.mxu0
    %v247 = vadd.f32 0.0, %v246
    %248 = vmatmul.f32.gmra.mxu0 %v137
    %v249 = vpop.f32.mrf.mxu0
    %v250 = vadd.f32 0.0, %v249
    %251 = vmatmul.f32.gmra.mxu0 %v140
    %v252 = vpop.f32.mrf.mxu0
    %v253 = vadd.f32 0.0, %v252
    %254 = vmatmul.f32.gmra.mxu0 %v143
    %v255 = vpop.f32.mrf.mxu0
    %v256 = vadd.f32 0.0, %v255
    %257 = vmatmul.f32.gmra.mxu0 %v146
    %v258 = vpop.f32.mrf.mxu0
    %v259 = vadd.f32 0.0, %v258
    %260 = vmatmul.f32.gmra.mxu0 %v149
    %v261 = vpop.f32.mrf.mxu0
    %v262 = vadd.f32 0.0, %v261
    %263 = vmatmul.f32.gmra.mxu0 %v152
    %v264 = vpop.f32.mrf.mxu0
    %v265 = vadd.f32 0.0, %v264
    %266 = vmatmul.f32.gmra.mxu0 %v155
    %v267 = vpop.f32.mrf.mxu0
    %v268 = vadd.f32 0.0, %v267
    %269 = vmatmul.f32.gmra.mxu0 %v158
    %v270 = vpop.f32.mrf.mxu0
    %v271 = vadd.f32 0.0, %v270
    %272 = vmatmul.f32.gmra.mxu0 %v161
    %v273 = vpop.f32.mrf.mxu0
    %v274 = vadd.f32 0.0, %v273
    %275 = vmatmul.f32.gmra.mxu0 %v164
    %v276 = vpop.f32.mrf.mxu0
    %v277 = vadd.f32 0.0, %v276
    %278 = vmatmul.f32.gmra.mxu0 %v167
    %v279 = vpop.f32.mrf.mxu0
    %v280 = vadd.f32 0.0, %v279
    %281 = vmatmul.f32.gmra.mxu0 %v170
    %v282 = vpop.f32.mrf.mxu0
    %v283 = vadd.f32 0.0, %v282
    %284 = vmatmul.f32.gmra.mxu0 %v173
    %v285 = vpop.f32.mrf.mxu0
    %v286 = vadd.f32 0.0, %v285
    %287 = vmatmul.f32.gmra.mxu0 %v176
    %v288 = vpop.f32.mrf.mxu0
    %v289 = vadd.f32 0.0, %v288
    %290 = vmatmul.f32.gmra.mxu0 %v179
    %v291 = vpop.f32.mrf.mxu0
    %v292 = vadd.f32 0.0, %v291
    %293 = vmatmul.f32.gmra.mxu0 %v182
    %v294 = vpop.f32.mrf.mxu0
    %v295 = vadd.f32 0.0, %v294
    %296 = vmatmul.f32.gmra.mxu0 %v185
    %v297 = vpop.f32.mrf.mxu0
    %v298 = vadd.f32 0.0, %v297
    %299 = vmatmul.f32.gmra.mxu0 %v188
    %v300 = vpop.f32.mrf.mxu0
    %v301 = vadd.f32 0.0, %v300
    %302 = vmatmul.f32.gmra.mxu0 %v191
    %v303 = vpop.f32.mrf.mxu0
    %v304 = vadd.f32 0.0, %v303
    %305 = vdwg.mxu0
    %338 = vrot.lane.b32.xlu0 %v211, 32
    %v339 = vpop.permute.xlu0 %338
    %340 = vrot.lane.b32.xlu0 %v214, 32
    %v341 = vpop.permute.xlu0 %340
    %342 = vrot.lane.b32.xlu0 %v217, 32
    %v343 = vpop.permute.xlu0 %342
    %344 = vrot.lane.b32.xlu0 %v220, 32
    %v345 = vpop.permute.xlu0 %344
    %346 = vrot.lane.b32.xlu0 %v223, 32
    %v347 = vpop.permute.xlu0 %346
    %348 = vrot.lane.b32.xlu0 %v226, 32
    %v349 = vpop.permute.xlu0 %348
    %350 = vrot.lane.b32.xlu0 %v229, 32
    %v351 = vpop.permute.xlu0 %350
    %352 = vrot.lane.b32.xlu0 %v232, 32
    %v353 = vpop.permute.xlu0 %352
    %354 = vrot.lane.b32.xlu0 %v235, 32
    %v355 = vpop.permute.xlu0 %354
    %356 = vrot.lane.b32.xlu0 %v238, 32
    %v357 = vpop.permute.xlu0 %356
    %358 = vrot.lane.b32.xlu0 %v241, 32
    %v359 = vpop.permute.xlu0 %358
    %360 = vrot.lane.b32.xlu0 %v244, 32
    %v361 = vpop.permute.xlu0 %360
    %362 = vrot.lane.b32.xlu0 %v247, 32
    %v363 = vpop.permute.xlu0 %362
    %364 = vrot.lane.b32.xlu0 %v250, 32
    %v365 = vpop.permute.xlu0 %364
    %366 = vrot.lane.b32.xlu0 %v253, 32
    %v367 = vpop.permute.xlu0 %366
    %368 = vrot.lane.b32.xlu0 %v256, 32
    %v369 = vpop.permute.xlu0 %368
    %370 = vrot.lane.b32.xlu0 %v259, 32
    %v371 = vpop.permute.xlu0 %370
    %372 = vrot.lane.b32.xlu0 %v262, 32
    %v373 = vpop.permute.xlu0 %372
    %374 = vrot.lane.b32.xlu0 %v265, 32
    %v375 = vpop.permute.xlu0 %374
    %376 = vrot.lane.b32.xlu0 %v268, 32
    %v377 = vpop.permute.xlu0 %376
    %378 = vrot.lane.b32.xlu0 %v271, 32
    %v379 = vpop.permute.xlu0 %378
    %380 = vrot.lane.b32.xlu0 %v274, 32
    %v381 = vpop.permute.xlu0 %380
    %382 = vrot.lane.b32.xlu0 %v277, 32
    %v383 = vpop.permute.xlu0 %382
    %384 = vrot.lane.b32.xlu0 %v280, 32
    %v385 = vpop.permute.xlu0 %384
    %386 = vrot.lane.b32.xlu0 %v283, 32
    %v387 = vpop.permute.xlu0 %386
    %388 = vrot.lane.b32.xlu0 %v286, 32
    %v389 = vpop.permute.xlu0 %388
    %390 = vrot.lane.b32.xlu0 %v289, 32
    %v391 = vpop.permute.xlu0 %390
    %392 = vrot.lane.b32.xlu0 %v292, 32
    %v393 = vpop.permute.xlu0 %392
    %394 = vrot.lane.b32.xlu0 %v295, 32
    %v395 = vpop.permute.xlu0 %394
    %396 = vrot.lane.b32.xlu0 %v298, 32
    %v397 = vpop.permute.xlu0 %396
    %398 = vrot.lane.b32.xlu0 %v301, 32
    %v399 = vpop.permute.xlu0 %398
    %400 = vrot.lane.b32.xlu0 %v304, 32
    %v401 = vpop.permute.xlu0 %400
    %v434 = vadd.f32 %v58, %v339
    %v435 = vadd.f32 %v61, %v341
    %v436 = vadd.f32 %v58, %v343
    %v437 = vadd.f32 %v61, %v345
    %v438 = vadd.f32 %v58, %v347
    %v439 = vadd.f32 %v61, %v349
    %v440 = vadd.f32 %v58, %v351
    %v441 = vadd.f32 %v61, %v353
    %v442 = vadd.f32 %v58, %v355
    %v443 = vadd.f32 %v61, %v357
    %v444 = vadd.f32 %v58, %v359
    %v445 = vadd.f32 %v61, %v361
    %v446 = vadd.f32 %v58, %v363
    %v447 = vadd.f32 %v61, %v365
    %v448 = vadd.f32 %v58, %v367
    %v449 = vadd.f32 %v61, %v369
    %v450 = vadd.f32 %v58, %v371
    %v451 = vadd.f32 %v61, %v373
    %v452 = vadd.f32 %v58, %v375
    %v453 = vadd.f32 %v61, %v377
    %v454 = vadd.f32 %v58, %v379
    %v455 = vadd.f32 %v61, %v381
    %v456 = vadd.f32 %v58, %v383
    %v457 = vadd.f32 %v61, %v385
    %v458 = vadd.f32 %v58, %v387
    %v459 = vadd.f32 %v61, %v389
    %v460 = vadd.f32 %v58, %v391
    %v461 = vadd.f32 %v61, %v393
    %v462 = vadd.f32 %v58, %v395
    %v463 = vadd.f32 %v61, %v397
    %v464 = vadd.f32 %v58, %v399
    %v465 = vadd.f32 %v61, %v401
    %v468 = vrot.slane %v58, 1
    %v469 = vrot.slane %v58, 2
    %v470 = vrot.slane %v58, 3
    %v471 = vrot.slane %v58, 4
    %v472 = vrot.slane %v58, 5
    %v473 = vrot.slane %v58, 6
    %v474 = vrot.slane %v58, 7
    %v475 = vrot.slane %v61, 1
    %v476 = vrot.slane %v61, 2
    %v477 = vrot.slane %v61, 3
    %v478 = vrot.slane %v61, 4
    %v479 = vrot.slane %v61, 5
    %v480 = vrot.slane %v61, 6
    %v481 = vrot.slane %v61, 7
    %484 = vrot.lane.b32.xlu0 %v434, 96
    %v485 = vpop.permute.xlu0 %484
    %486 = vrot.lane.b32.xlu0 %v435, 96
    %v487 = vpop.permute.xlu0 %486
    %v488 = vsel %vm33, %v58, 0
    %v490 = vsel %vm33, %v485, 0
    %v492 = vsel %vm33, %v487, 0
    %494 = vmatpush.xpose.msra.mxu0 0.0
    %495 = vmatpush.xpose.msra.mxu0 0.0
    %496 = vmatpush.xpose.msra.mxu0 0.0
    %497 = vmatpush.xpose.msra.mxu0 0.0
    %498 = vmatpush.xpose.msra.mxu0 0.0
    %499 = vmatpush.xpose.msra.mxu0 0.0
    %500 = vmatpush.xpose.msra.mxu0 0.0
    %501 = vmatpush.xpose.msra.mxu0 0.0
    %502 = vmatpush.xpose.msra.mxu0 0.0
    %503 = vmatpush.xpose.msra.mxu0 0.0
    %504 = vmatpush.xpose.msra.mxu0 0.0
    %505 = vmatpush.xpose.msra.mxu0 0.0
    %506 = vmatpush.xpose.msra.mxu0 0.0
    %507 = vmatpush.xpose.msra.mxu0 0.0
    %508 = vmatpush.xpose.msra.mxu0 %v492
    %509 = vmatpush.xpose.msra.mxu0 %v490
    %510 = vmatmul.f32.gmra.mxu0 %v488
    %v511 = vpop.f32.mrf.mxu0
    %v512 = vadd.f32 0.0, %v511
    %513 = vdwg.mxu0
    %516 = vrot.lane.b32.xlu0 %v436, 96
    %v517 = vpop.permute.xlu0 %516
    %518 = vrot.lane.b32.xlu0 %v437, 96
    %v519 = vpop.permute.xlu0 %518
    %v520 = vsel %vm33, %v468, 0
    %v522 = vsel %vm33, %v517, 0
    %v524 = vsel %vm33, %v519, 0
    %526 = vmatpush.xpose.msra.mxu0 0.0
    %527 = vmatpush.xpose.msra.mxu0 0.0
    %528 = vmatpush.xpose.msra.mxu0 0.0
    %529 = vmatpush.xpose.msra.mxu0 0.0
    %530 = vmatpush.xpose.msra.mxu0 0.0
    %531 = vmatpush.xpose.msra.mxu0 0.0
    %532 = vmatpush.xpose.msra.mxu0 0.0
    %533 = vmatpush.xpose.msra.mxu0 0.0
    %534 = vmatpush.xpose.msra.mxu0 0.0
    %535 = vmatpush.xpose.msra.mxu0 0.0
    %536 = vmatpush.xpose.msra.mxu0 0.0
    %537 = vmatpush.xpose.msra.mxu0 0.0
    %538 = vmatpush.xpose.msra.mxu0 0.0
    %539 = vmatpush.xpose.msra.mxu0 0.0
    %540 = vmatpush.xpose.msra.mxu0 %v524
    %541 = vmatpush.xpose.msra.mxu0 %v522
    %542 = vmatmul.f32.gmra.mxu0 %v520
    %v543 = vpop.f32.mrf.mxu0
    %v544 = vadd.f32 0.0, %v543
    %545 = vdwg.mxu0
    %548 = vrot.lane.b32.xlu0 %v438, 96
    %v549 = vpop.permute.xlu0 %548
    %550 = vrot.lane.b32.xlu0 %v439, 96
    %v551 = vpop.permute.xlu0 %550
    %v552 = vsel %vm33, %v469, 0
    %v554 = vsel %vm33, %v549, 0
    %v556 = vsel %vm33, %v551, 0
    %558 = vmatpush.xpose.msra.mxu0 0.0
    %559 = vmatpush.xpose.msra.mxu0 0.0
    %560 = vmatpush.xpose.msra.mxu0 0.0
    %561 = vmatpush.xpose.msra.mxu0 0.0
    %562 = vmatpush.xpose.msra.mxu0 0.0
    %563 = vmatpush.xpose.msra.mxu0 0.0
    %564 = vmatpush.xpose.msra.mxu0 0.0
    %565 = vmatpush.xpose.msra.mxu0 0.0
    %566 = vmatpush.xpose.msra.mxu0 0.0
    %567 = vmatpush.xpose.msra.mxu0 0.0
    %568 = vmatpush.xpose.msra.mxu0 0.0
    %569 = vmatpush.xpose.msra.mxu0 0.0
    %570 = vmatpush.xpose.msra.mxu0 0.0
    %571 = vmatpush.xpose.msra.mxu0 0.0
    %572 = vmatpush.xpose.msra.mxu0 %v556
    %573 = vmatpush.xpose.msra.mxu0 %v554
    %574 = vmatmul.f32.gmra.mxu0 %v552
    %v575 = vpop.f32.mrf.mxu0
    %v576 = vadd.f32 0.0, %v575
    %577 = vdwg.mxu0
    %580 = vrot.lane.b32.xlu0 %v440, 96
    %v581 = vpop.permute.xlu0 %580
    %582 = vrot.lane.b32.xlu0 %v441, 96
    %v583 = vpop.permute.xlu0 %582
    %v584 = vsel %vm33, %v470, 0
    %v586 = vsel %vm33, %v581, 0
    %v588 = vsel %vm33, %v583, 0
    %590 = vmatpush.xpose.msra.mxu0 0.0
    %591 = vmatpush.xpose.msra.mxu0 0.0
    %592 = vmatpush.xpose.msra.mxu0 0.0
    %593 = vmatpush.xpose.msra.mxu0 0.0
    %594 = vmatpush.xpose.msra.mxu0 0.0
    %595 = vmatpush.xpose.msra.mxu0 0.0
    %596 = vmatpush.xpose.msra.mxu0 0.0
    %597 = vmatpush.xpose.msra.mxu0 0.0
    %598 = vmatpush.xpose.msra.mxu0 0.0
    %599 = vmatpush.xpose.msra.mxu0 0.0
    %600 = vmatpush.xpose.msra.mxu0 0.0
    %601 = vmatpush.xpose.msra.mxu0 0.0
    %602 = vmatpush.xpose.msra.mxu0 0.0
    %603 = vmatpush.xpose.msra.mxu0 0.0
    %604 = vmatpush.xpose.msra.mxu0 %v588
    %605 = vmatpush.xpose.msra.mxu0 %v586
    %606 = vmatmul.f32.gmra.mxu0 %v584
    %v607 = vpop.f32.mrf.mxu0
    %v608 = vadd.f32 0.0, %v607
    %609 = vdwg.mxu0
    %612 = vrot.lane.b32.xlu0 %v442, 96
    %v613 = vpop.permute.xlu0 %612
    %614 = vrot.lane.b32.xlu0 %v443, 96
    %v615 = vpop.permute.xlu0 %614
    %v616 = vsel %vm33, %v471, 0
    %v618 = vsel %vm33, %v613, 0
    %v620 = vsel %vm33, %v615, 0
    %622 = vmatpush.xpose.msra.mxu0 0.0
    %623 = vmatpush.xpose.msra.mxu0 0.0
    %624 = vmatpush.xpose.msra.mxu0 0.0
    %625 = vmatpush.xpose.msra.mxu0 0.0
    %626 = vmatpush.xpose.msra.mxu0 0.0
    %627 = vmatpush.xpose.msra.mxu0 0.0
    %628 = vmatpush.xpose.msra.mxu0 0.0
    %629 = vmatpush.xpose.msra.mxu0 0.0
    %630 = vmatpush.xpose.msra.mxu0 0.0
    %631 = vmatpush.xpose.msra.mxu0 0.0
    %632 = vmatpush.xpose.msra.mxu0 0.0
    %633 = vmatpush.xpose.msra.mxu0 0.0
    %634 = vmatpush.xpose.msra.mxu0 0.0
    %635 = vmatpush.xpose.msra.mxu0 0.0
    %636 = vmatpush.xpose.msra.mxu0 %v620
    %637 = vmatpush.xpose.msra.mxu0 %v618
    %638 = vmatmul.f32.gmra.mxu0 %v616
    %v639 = vpop.f32.mrf.mxu0
    %v640 = vadd.f32 0.0, %v639
    %641 = vdwg.mxu0
    %644 = vrot.lane.b32.xlu0 %v444, 96
    %v645 = vpop.permute.xlu0 %644
    %646 = vrot.lane.b32.xlu0 %v445, 96
    %v647 = vpop.permute.xlu0 %646
    %v648 = vsel %vm33, %v472, 0
    %v650 = vsel %vm33, %v645, 0
    %v652 = vsel %vm33, %v647, 0
    %654 = vmatpush.xpose.msra.mxu0 0.0
    %655 = vmatpush.xpose.msra.mxu0 0.0
    %656 = vmatpush.xpose.msra.mxu0 0.0
    %657 = vmatpush.xpose.msra.mxu0 0.0
    %658 = vmatpush.xpose.msra.mxu0 0.0
    %659 = vmatpush.xpose.msra.mxu0 0.0
    %660 = vmatpush.xpose.msra.mxu0 0.0
    %661 = vmatpush.xpose.msra.mxu0 0.0
    %662 = vmatpush.xpose.msra.mxu0 0.0
    %663 = vmatpush.xpose.msra.mxu0 0.0
    %664 = vmatpush.xpose.msra.mxu0 0.0
    %665 = vmatpush.xpose.msra.mxu0 0.0
    %666 = vmatpush.xpose.msra.mxu0 0.0
    %667 = vmatpush.xpose.msra.mxu0 0.0
    %668 = vmatpush.xpose.msra.mxu0 %v652
    %669 = vmatpush.xpose.msra.mxu0 %v650
    %670 = vmatmul.f32.gmra.mxu0 %v648
    %v671 = vpop.f32.mrf.mxu0
    %v672 = vadd.f32 0.0, %v671
    %673 = vdwg.mxu0
    %676 = vrot.lane.b32.xlu0 %v446, 96
    %v677 = vpop.permute.xlu0 %676
    %678 = vrot.lane.b32.xlu0 %v447, 96
    %v679 = vpop.permute.xlu0 %678
    %v680 = vsel %vm33, %v473, 0
    %v682 = vsel %vm33, %v677, 0
    %v684 = vsel %vm33, %v679, 0
    %686 = vmatpush.xpose.msra.mxu0 0.0
    %687 = vmatpush.xpose.msra.mxu0 0.0
    %688 = vmatpush.xpose.msra.mxu0 0.0
    %689 = vmatpush.xpose.msra.mxu0 0.0
    %690 = vmatpush.xpose.msra.mxu0 0.0
    %691 = vmatpush.xpose.msra.mxu0 0.0
    %692 = vmatpush.xpose.msra.mxu0 0.0
    %693 = vmatpush.xpose.msra.mxu0 0.0
    %694 = vmatpush.xpose.msra.mxu0 0.0
    %695 = vmatpush.xpose.msra.mxu0 0.0
    %696 = vmatpush.xpose.msra.mxu0 0.0
    %697 = vmatpush.xpose.msra.mxu0 0.0
    %698 = vmatpush.xpose.msra.mxu0 0.0
    %699 = vmatpush.xpose.msra.mxu0 0.0
    %700 = vmatpush.xpose.msra.mxu0 %v684
    %701 = vmatpush.xpose.msra.mxu0 %v682
    %702 = vmatmul.f32.gmra.mxu0 %v680
    %v703 = vpop.f32.mrf.mxu0
    %v704 = vadd.f32 0.0, %v703
    %705 = vdwg.mxu0
    %708 = vrot.lane.b32.xlu0 %v448, 96
    %v709 = vpop.permute.xlu0 %708
    %710 = vrot.lane.b32.xlu0 %v449, 96
    %v711 = vpop.permute.xlu0 %710
    %v712 = vsel %vm33, %v474, 0
    %v714 = vsel %vm33, %v709, 0
    %v716 = vsel %vm33, %v711, 0
    %718 = vmatpush.xpose.msra.mxu0 0.0
    %719 = vmatpush.xpose.msra.mxu0 0.0
    %720 = vmatpush.xpose.msra.mxu0 0.0
    %721 = vmatpush.xpose.msra.mxu0 0.0
    %722 = vmatpush.xpose.msra.mxu0 0.0
    %723 = vmatpush.xpose.msra.mxu0 0.0
    %724 = vmatpush.xpose.msra.mxu0 0.0
    %725 = vmatpush.xpose.msra.mxu0 0.0
    %726 = vmatpush.xpose.msra.mxu0 0.0
    %727 = vmatpush.xpose.msra.mxu0 0.0
    %728 = vmatpush.xpose.msra.mxu0 0.0
    %729 = vmatpush.xpose.msra.mxu0 0.0
    %730 = vmatpush.xpose.msra.mxu0 0.0
    %731 = vmatpush.xpose.msra.mxu0 0.0
    %732 = vmatpush.xpose.msra.mxu0 %v716
    %733 = vmatpush.xpose.msra.mxu0 %v714
    %734 = vmatmul.f32.gmra.mxu0 %v712
    %v735 = vpop.f32.mrf.mxu0
    %v736 = vadd.f32 0.0, %v735
    %737 = vdwg.mxu0
    %740 = vrot.lane.b32.xlu0 %v450, 96
    %v741 = vpop.permute.xlu0 %740
    %742 = vrot.lane.b32.xlu0 %v451, 96
    %v743 = vpop.permute.xlu0 %742
    %v744 = vsel %vm33, %v61, 0
    %v746 = vsel %vm33, %v741, 0
    %v748 = vsel %vm33, %v743, 0
    %750 = vmatpush.xpose.msra.mxu0 0.0
    %751 = vmatpush.xpose.msra.mxu0 0.0
    %752 = vmatpush.xpose.msra.mxu0 0.0
    %753 = vmatpush.xpose.msra.mxu0 0.0
    %754 = vmatpush.xpose.msra.mxu0 0.0
    %755 = vmatpush.xpose.msra.mxu0 0.0
    %756 = vmatpush.xpose.msra.mxu0 0.0
    %757 = vmatpush.xpose.msra.mxu0 0.0
    %758 = vmatpush.xpose.msra.mxu0 0.0
    %759 = vmatpush.xpose.msra.mxu0 0.0
    %760 = vmatpush.xpose.msra.mxu0 0.0
    %761 = vmatpush.xpose.msra.mxu0 0.0
    %762 = vmatpush.xpose.msra.mxu0 0.0
    %763 = vmatpush.xpose.msra.mxu0 0.0
    %764 = vmatpush.xpose.msra.mxu0 %v748
    %765 = vmatpush.xpose.msra.mxu0 %v746
    %766 = vmatmul.f32.gmra.mxu0 %v744
    %v767 = vpop.f32.mrf.mxu0
    %v768 = vadd.f32 0.0, %v767
    %769 = vdwg.mxu0
    %772 = vrot.lane.b32.xlu0 %v452, 96
    %v773 = vpop.permute.xlu0 %772
    %774 = vrot.lane.b32.xlu0 %v453, 96
    %v775 = vpop.permute.xlu0 %774
    %v776 = vsel %vm33, %v475, 0
    %v778 = vsel %vm33, %v773, 0
    %v780 = vsel %vm33, %v775, 0
    %782 = vmatpush.xpose.msra.mxu0 0.0
    %783 = vmatpush.xpose.msra.mxu0 0.0
    %784 = vmatpush.xpose.msra.mxu0 0.0
    %785 = vmatpush.xpose.msra.mxu0 0.0
    %786 = vmatpush.xpose.msra.mxu0 0.0
    %787 = vmatpush.xpose.msra.mxu0 0.0
    %788 = vmatpush.xpose.msra.mxu0 0.0
    %789 = vmatpush.xpose.msra.mxu0 0.0
    %790 = vmatpush.xpose.msra.mxu0 0.0
    %791 = vmatpush.xpose.msra.mxu0 0.0
    %792 = vmatpush.xpose.msra.mxu0 0.0
    %793 = vmatpush.xpose.msra.mxu0 0.0
    %794 = vmatpush.xpose.msra.mxu0 0.0
    %795 = vmatpush.xpose.msra.mxu0 0.0
    %796 = vmatpush.xpose.msra.mxu0 %v780
    %797 = vmatpush.xpose.msra.mxu0 %v778
    %798 = vmatmul.f32.gmra.mxu0 %v776
    %v799 = vpop.f32.mrf.mxu0
    %v800 = vadd.f32 0.0, %v799
    %801 = vdwg.mxu0
    %804 = vrot.lane.b32.xlu0 %v454, 96
    %v805 = vpop.permute.xlu0 %804
    %806 = vrot.lane.b32.xlu0 %v455, 96
    %v807 = vpop.permute.xlu0 %806
    %v808 = vsel %vm33, %v476, 0
    %v810 = vsel %vm33, %v805, 0
    %v812 = vsel %vm33, %v807, 0
    %814 = vmatpush.xpose.msra.mxu0 0.0
    %815 = vmatpush.xpose.msra.mxu0 0.0
    %816 = vmatpush.xpose.msra.mxu0 0.0
    %817 = vmatpush.xpose.msra.mxu0 0.0
    %818 = vmatpush.xpose.msra.mxu0 0.0
    %819 = vmatpush.xpose.msra.mxu0 0.0
    %820 = vmatpush.xpose.msra.mxu0 0.0
    %821 = vmatpush.xpose.msra.mxu0 0.0
    %822 = vmatpush.xpose.msra.mxu0 0.0
    %823 = vmatpush.xpose.msra.mxu0 0.0
    %824 = vmatpush.xpose.msra.mxu0 0.0
    %825 = vmatpush.xpose.msra.mxu0 0.0
    %826 = vmatpush.xpose.msra.mxu0 0.0
    %827 = vmatpush.xpose.msra.mxu0 0.0
    %828 = vmatpush.xpose.msra.mxu0 %v812
    %829 = vmatpush.xpose.msra.mxu0 %v810
    %830 = vmatmul.f32.gmra.mxu0 %v808
    %v831 = vpop.f32.mrf.mxu0
    %v832 = vadd.f32 0.0, %v831
    %833 = vdwg.mxu0
    %836 = vrot.lane.b32.xlu0 %v456, 96
    %v837 = vpop.permute.xlu0 %836
    %838 = vrot.lane.b32.xlu0 %v457, 96
    %v839 = vpop.permute.xlu0 %838
    %v840 = vsel %vm33, %v477, 0
    %v842 = vsel %vm33, %v837, 0
    %v844 = vsel %vm33, %v839, 0
    %846 = vmatpush.xpose.msra.mxu0 0.0
    %847 = vmatpush.xpose.msra.mxu0 0.0
    %848 = vmatpush.xpose.msra.mxu0 0.0
    %849 = vmatpush.xpose.msra.mxu0 0.0
    %850 = vmatpush.xpose.msra.mxu0 0.0
    %851 = vmatpush.xpose.msra.mxu0 0.0
    %852 = vmatpush.xpose.msra.mxu0 0.0
    %853 = vmatpush.xpose.msra.mxu0 0.0
    %854 = vmatpush.xpose.msra.mxu0 0.0
    %855 = vmatpush.xpose.msra.mxu0 0.0
    %856 = vmatpush.xpose.msra.mxu0 0.0
    %857 = vmatpush.xpose.msra.mxu0 0.0
    %858 = vmatpush.xpose.msra.mxu0 0.0
    %859 = vmatpush.xpose.msra.mxu0 0.0
    %860 = vmatpush.xpose.msra.mxu0 %v844
    %861 = vmatpush.xpose.msra.mxu0 %v842
    %862 = vmatmul.f32.gmra.mxu0 %v840
    %v863 = vpop.f32.mrf.mxu0
    %v864 = vadd.f32 0.0, %v863
    %865 = vdwg.mxu0
    %868 = vrot.lane.b32.xlu0 %v458, 96
    %v869 = vpop.permute.xlu0 %868
    %870 = vrot.lane.b32.xlu0 %v459, 96
    %v871 = vpop.permute.xlu0 %870
    %v872 = vsel %vm33, %v478, 0
    %v874 = vsel %vm33, %v869, 0
    %v876 = vsel %vm33, %v871, 0
    %878 = vmatpush.xpose.msra.mxu0 0.0
    %879 = vmatpush.xpose.msra.mxu0 0.0
    %880 = vmatpush.xpose.msra.mxu0 0.0
    %881 = vmatpush.xpose.msra.mxu0 0.0
    %882 = vmatpush.xpose.msra.mxu0 0.0
    %883 = vmatpush.xpose.msra.mxu0 0.0
    %884 = vmatpush.xpose.msra.mxu0 0.0
    %885 = vmatpush.xpose.msra.mxu0 0.0
    %886 = vmatpush.xpose.msra.mxu0 0.0
    %887 = vmatpush.xpose.msra.mxu0 0.0
    %888 = vmatpush.xpose.msra.mxu0 0.0
    %889 = vmatpush.xpose.msra.mxu0 0.0
    %890 = vmatpush.xpose.msra.mxu0 0.0
    %891 = vmatpush.xpose.msra.mxu0 0.0
    %892 = vmatpush.xpose.msra.mxu0 %v876
    %893 = vmatpush.xpose.msra.mxu0 %v874
    %894 = vmatmul.f32.gmra.mxu0 %v872
    %v895 = vpop.f32.mrf.mxu0
    %v896 = vadd.f32 0.0, %v895
    %897 = vdwg.mxu0
    %900 = vrot.lane.b32.xlu0 %v460, 96
    %v901 = vpop.permute.xlu0 %900
    %902 = vrot.lane.b32.xlu0 %v461, 96
    %v903 = vpop.permute.xlu0 %902
    %v904 = vsel %vm33, %v479, 0
    %v906 = vsel %vm33, %v901, 0
    %v908 = vsel %vm33, %v903, 0
    %910 = vmatpush.xpose.msra.mxu0 0.0
    %911 = vmatpush.xpose.msra.mxu0 0.0
    %912 = vmatpush.xpose.msra.mxu0 0.0
    %913 = vmatpush.xpose.msra.mxu0 0.0
    %914 = vmatpush.xpose.msra.mxu0 0.0
    %915 = vmatpush.xpose.msra.mxu0 0.0
    %916 = vmatpush.xpose.msra.mxu0 0.0
    %917 = vmatpush.xpose.msra.mxu0 0.0
    %918 = vmatpush.xpose.msra.mxu0 0.0
    %919 = vmatpush.xpose.msra.mxu0 0.0
    %920 = vmatpush.xpose.msra.mxu0 0.0
    %921 = vmatpush.xpose.msra.mxu0 0.0
    %922 = vmatpush.xpose.msra.mxu0 0.0
    %923 = vmatpush.xpose.msra.mxu0 0.0
    %924 = vmatpush.xpose.msra.mxu0 %v908
    %925 = vmatpush.xpose.msra.mxu0 %v906
    %926 = vmatmul.f32.gmra.mxu0 %v904
    %v927 = vpop.f32.mrf.mxu0
    %v928 = vadd.f32 0.0, %v927
    %929 = vdwg.mxu0
    %932 = vrot.lane.b32.xlu0 %v462, 96
    %v933 = vpop.permute.xlu0 %932
    %934 = vrot.lane.b32.xlu0 %v463, 96
    %v935 = vpop.permute.xlu0 %934
    %v936 = vsel %vm33, %v480, 0
    %v938 = vsel %vm33, %v933, 0
    %v940 = vsel %vm33, %v935, 0
    %942 = vmatpush.xpose.msra.mxu0 0.0
    %943 = vmatpush.xpose.msra.mxu0 0.0
    %944 = vmatpush.xpose.msra.mxu0 0.0
    %945 = vmatpush.xpose.msra.mxu0 0.0
    %946 = vmatpush.xpose.msra.mxu0 0.0
    %947 = vmatpush.xpose.msra.mxu0 0.0
    %948 = vmatpush.xpose.msra.mxu0 0.0
    %949 = vmatpush.xpose.msra.mxu0 0.0
    %950 = vmatpush.xpose.msra.mxu0 0.0
    %951 = vmatpush.xpose.msra.mxu0 0.0
    %952 = vmatpush.xpose.msra.mxu0 0.0
    %953 = vmatpush.xpose.msra.mxu0 0.0
    %954 = vmatpush.xpose.msra.mxu0 0.0
    %955 = vmatpush.xpose.msra.mxu0 0.0
    %956 = vmatpush.xpose.msra.mxu0 %v940
    %957 = vmatpush.xpose.msra.mxu0 %v938
    %958 = vmatmul.f32.gmra.mxu0 %v936
    %v959 = vpop.f32.mrf.mxu0
    %v960 = vadd.f32 0.0, %v959
    %961 = vdwg.mxu0
    %964 = vrot.lane.b32.xlu0 %v464, 96
    %v965 = vpop.permute.xlu0 %964
    %966 = vrot.lane.b32.xlu0 %v465, 96
    %v967 = vpop.permute.xlu0 %966
    %v968 = vsel %vm33, %v481, 0
    %v970 = vsel %vm33, %v965, 0
    %v972 = vsel %vm33, %v967, 0
    %974 = vmatpush.xpose.msra.mxu0 0.0
    %975 = vmatpush.xpose.msra.mxu0 0.0
    %976 = vmatpush.xpose.msra.mxu0 0.0
    %977 = vmatpush.xpose.msra.mxu0 0.0
    %978 = vmatpush.xpose.msra.mxu0 0.0
    %979 = vmatpush.xpose.msra.mxu0 0.0
    %980 = vmatpush.xpose.msra.mxu0 0.0
    %981 = vmatpush.xpose.msra.mxu0 0.0
    %982 = vmatpush.xpose.msra.mxu0 0.0
    %983 = vmatpush.xpose.msra.mxu0 0.0
    %984 = vmatpush.xpose.msra.mxu0 0.0
    %985 = vmatpush.xpose.msra.mxu0 0.0
    %986 = vmatpush.xpose.msra.mxu0 0.0
    %987 = vmatpush.xpose.msra.mxu0 0.0
    %988 = vmatpush.xpose.msra.mxu0 %v972
    %989 = vmatpush.xpose.msra.mxu0 %v970
    %990 = vmatmul.f32.gmra.mxu0 %v968
    %v991 = vpop.f32.mrf.mxu0
    %v992 = vadd.f32 0.0, %v991
    %993 = vdwg.mxu0
    %v994 = vmul.f32 %v512, 0.17677669
    %v995 = vmul.f32 %v544, 0.17677669
    %v996 = vmul.f32 %v576, 0.17677669
    %v997 = vmul.f32 %v608, 0.17677669
    %v998 = vmul.f32 %v640, 0.17677669
    %v999 = vmul.f32 %v672, 0.17677669
    %v1000 = vmul.f32 %v704, 0.17677669
    %v1001 = vmul.f32 %v736, 0.17677669
    %v1002 = vmul.f32 %v768, 0.17677669
    %v1003 = vmul.f32 %v800, 0.17677669
    %v1004 = vmul.f32 %v832, 0.17677669
    %v1005 = vmul.f32 %v864, 0.17677669
    %v1006 = vmul.f32 %v896, 0.17677669
    %v1007 = vmul.f32 %v928, 0.17677669
    %v1008 = vmul.f32 %v960, 0.17677669
    %v1009 = vmul.f32 %v992, 0.17677669
    %v1010 = vld [vmem:[%s1] sm:$0xff]
    %v1011 = vld [vmem:[%s1 + $0x8] sm:$0xff]
    %vm1012 = vcmp.gt.f32.partialorder %v1010, 0.0
    %vm1013 = vcmp.gt.f32.partialorder %v1011, 0.0
    %v1030 = vrot.slane %v995, 7
    %vm1031 = vcmask 1041409
    %v1032 = vsel %vm1031, %v1030, %v994
    %v1033 = vrot.slane %v996, 6
    %vm1034 = vcmask 1042434
    %v1035 = vsel %vm1034, %v1033, %v1032
    %v1036 = vrot.slane %v997, 5
    %vm1037 = vcmask 1043459
    %v1038 = vsel %vm1037, %v1036, %v1035
    %v1039 = vrot.slane %v998, 4
    %vm1040 = vcmask 1044484
    %v1041 = vsel %vm1040, %v1039, %v1038
    %v1042 = vrot.slane %v999, 3
    %vm1043 = vcmask 1045509
    %v1044 = vsel %vm1043, %v1042, %v1041
    %v1045 = vrot.slane %v1000, 2
    %vm1046 = vcmask 1046534
    %v1047 = vsel %vm1046, %v1045, %v1044
    %v1048 = vrot.slane %v1001, 1
    %vm1049 = vcmask 1047559
    %v1050 = vsel %vm1049, %v1048, %v1047
    %v1051 = vrot.slane %v1003, 7
    %v1052 = vsel %vm1031, %v1051, %v1002
    %v1053 = vrot.slane %v1004, 6
    %v1054 = vsel %vm1034, %v1053, %v1052
    %v1055 = vrot.slane %v1005, 5
    %v1056 = vsel %vm1037, %v1055, %v1054
    %v1057 = vrot.slane %v1006, 4
    %v1058 = vsel %vm1040, %v1057, %v1056
    %v1059 = vrot.slane %v1007, 3
    %v1060 = vsel %vm1043, %v1059, %v1058
    %v1061 = vrot.slane %v1008, 2
    %v1062 = vsel %vm1046, %v1061, %v1060
    %v1063 = vrot.slane %v1009, 1
    %v1064 = vsel %vm1049, %v1063, %v1062
    %v1067 = vsel %vm1012, %v1050, -1e+30
    %v1068 = vsel %vm1013, %v1064, -1e+30
    %vm1069 = vcmask 130048
    %v1070 = vsel %vm1069, %v1067, -inf
    %1071 = vmax.xlane.f32.xlu0 %v1070
    %v1072 = vpop.xlane.xlu0 %1071
    %v1073 = vsel %vm1069, %v1068, -inf
    %1074 = vmax.xlane.f32.xlu0 %v1073
    %v1075 = vpop.xlane.xlu0 %1074
    %v1076 = vsub.f32 %v1067, %v1072
    %v1077 = vsub.f32 %v1068, %v1075
    %v1078 = vmul.f32 %v1076, 1.442695
    %v1079 = vpow.pop %v1078
    %v1080 = vmul.f32 %v1077, 1.442695
    %v1081 = vpow.pop %v1080
    %v1082 = vsel %vm1012, %v1079, 0.0
    %v1083 = vsel %vm1013, %v1081, 0.0
    %v1084 = vsel %vm1069, %v1082, 0.0
    %1085 = vadd.xlane.f32.xlu0 %v1084
    %v1086 = vpop.xlane.xlu0 %1085
    %v1087 = vsel %vm1069, %v1083, 0.0
    %1088 = vadd.xlane.f32.xlu0 %v1087
    %v1089 = vpop.xlane.xlu0 %1088
    %v1090 = vmax.f32 %v1086, 1e-30
    %v1091 = vmax.f32 %v1089, 1e-30
    %v1092 = vrcp.pop %v1090
    %v1093 = vrcp.pop %v1091
    %v1094 = vmul.f32 %v1082, %v1092
    %v1095 = vmul.f32 %v1083, %v1093
    %1096 = vrot.lane.b32.xlu0 %v211, 64
    %v1097 = vpop.permute.xlu0 %1096
    %1098 = vrot.lane.b32.xlu0 %v214, 64
    %v1099 = vpop.permute.xlu0 %1098
    %1100 = vrot.lane.b32.xlu0 %v217, 64
    %v1101 = vpop.permute.xlu0 %1100
    %1102 = vrot.lane.b32.xlu0 %v220, 64
    %v1103 = vpop.permute.xlu0 %1102
    %1104 = vrot.lane.b32.xlu0 %v223, 64
    %v1105 = vpop.permute.xlu0 %1104
    %1106 = vrot.lane.b32.xlu0 %v226, 64
    %v1107 = vpop.permute.xlu0 %1106
    %1108 = vrot.lane.b32.xlu0 %v229, 64
    %v1109 = vpop.permute.xlu0 %1108
    %1110 = vrot.lane.b32.xlu0 %v232, 64
    %v1111 = vpop.permute.xlu0 %1110
    %1112 = vrot.lane.b32.xlu0 %v235, 64
    %v1113 = vpop.permute.xlu0 %1112
    %1114 = vrot.lane.b32.xlu0 %v238, 64
    %v1115 = vpop.permute.xlu0 %1114
    %1116 = vrot.lane.b32.xlu0 %v241, 64
    %v1117 = vpop.permute.xlu0 %1116
    %1118 = vrot.lane.b32.xlu0 %v244, 64
    %v1119 = vpop.permute.xlu0 %1118
    %1120 = vrot.lane.b32.xlu0 %v247, 64
    %v1121 = vpop.permute.xlu0 %1120
    %1122 = vrot.lane.b32.xlu0 %v250, 64
    %v1123 = vpop.permute.xlu0 %1122
    %1124 = vrot.lane.b32.xlu0 %v253, 64
    %v1125 = vpop.permute.xlu0 %1124
    %1126 = vrot.lane.b32.xlu0 %v256, 64
    %v1127 = vpop.permute.xlu0 %1126
    %1128 = vrot.lane.b32.xlu0 %v259, 64
    %v1129 = vpop.permute.xlu0 %1128
    %1130 = vrot.lane.b32.xlu0 %v262, 64
    %v1131 = vpop.permute.xlu0 %1130
    %1132 = vrot.lane.b32.xlu0 %v265, 64
    %v1133 = vpop.permute.xlu0 %1132
    %1134 = vrot.lane.b32.xlu0 %v268, 64
    %v1135 = vpop.permute.xlu0 %1134
    %1136 = vrot.lane.b32.xlu0 %v271, 64
    %v1137 = vpop.permute.xlu0 %1136
    %1138 = vrot.lane.b32.xlu0 %v274, 64
    %v1139 = vpop.permute.xlu0 %1138
    %1140 = vrot.lane.b32.xlu0 %v277, 64
    %v1141 = vpop.permute.xlu0 %1140
    %1142 = vrot.lane.b32.xlu0 %v280, 64
    %v1143 = vpop.permute.xlu0 %1142
    %1144 = vrot.lane.b32.xlu0 %v283, 64
    %v1145 = vpop.permute.xlu0 %1144
    %1146 = vrot.lane.b32.xlu0 %v286, 64
    %v1147 = vpop.permute.xlu0 %1146
    %1148 = vrot.lane.b32.xlu0 %v289, 64
    %v1149 = vpop.permute.xlu0 %1148
    %1150 = vrot.lane.b32.xlu0 %v292, 64
    %v1151 = vpop.permute.xlu0 %1150
    %1152 = vrot.lane.b32.xlu0 %v295, 64
    %v1153 = vpop.permute.xlu0 %1152
    %1154 = vrot.lane.b32.xlu0 %v298, 64
    %v1155 = vpop.permute.xlu0 %1154
    %1156 = vrot.lane.b32.xlu0 %v301, 64
    %v1157 = vpop.permute.xlu0 %1156
    %1158 = vrot.lane.b32.xlu0 %v304, 64
    %v1159 = vpop.permute.xlu0 %1158
    %v1192 = vadd.f32 %v58, %v1097
    %v1193 = vadd.f32 %v61, %v1099
    %v1194 = vadd.f32 %v58, %v1101
    %v1195 = vadd.f32 %v61, %v1103
    %v1196 = vadd.f32 %v58, %v1105
    %v1197 = vadd.f32 %v61, %v1107
    %v1198 = vadd.f32 %v58, %v1109
    %v1199 = vadd.f32 %v61, %v1111
    %v1200 = vadd.f32 %v58, %v1113
    %v1201 = vadd.f32 %v61, %v1115
    %v1202 = vadd.f32 %v58, %v1117
    %v1203 = vadd.f32 %v61, %v1119
    %v1204 = vadd.f32 %v58, %v1121
    %v1205 = vadd.f32 %v61, %v1123
    %v1206 = vadd.f32 %v58, %v1125
    %v1207 = vadd.f32 %v61, %v1127
    %v1208 = vadd.f32 %v58, %v1129
    %v1209 = vadd.f32 %v61, %v1131
    %v1210 = vadd.f32 %v58, %v1133
    %v1211 = vadd.f32 %v61, %v1135
    %v1212 = vadd.f32 %v58, %v1137
    %v1213 = vadd.f32 %v61, %v1139
    %v1214 = vadd.f32 %v58, %v1141
    %v1215 = vadd.f32 %v61, %v1143
    %v1216 = vadd.f32 %v58, %v1145
    %v1217 = vadd.f32 %v61, %v1147
    %v1218 = vadd.f32 %v58, %v1149
    %v1219 = vadd.f32 %v61, %v1151
    %v1220 = vadd.f32 %v58, %v1153
    %v1221 = vadd.f32 %v61, %v1155
    %v1222 = vadd.f32 %v58, %v1157
    %v1223 = vadd.f32 %v61, %v1159
    %v1226 = vrot.slane %v1094, 1
    %v1227 = vrot.slane %v1094, 2
    %v1228 = vrot.slane %v1094, 3
    %v1229 = vrot.slane %v1094, 4
    %v1230 = vrot.slane %v1094, 5
    %v1231 = vrot.slane %v1094, 6
    %v1232 = vrot.slane %v1094, 7
    %v1233 = vrot.slane %v1095, 1
    %v1234 = vrot.slane %v1095, 2
    %v1235 = vrot.slane %v1095, 3
    %v1236 = vrot.slane %v1095, 4
    %v1237 = vrot.slane %v1095, 5
    %v1238 = vrot.slane %v1095, 6
    %v1239 = vrot.slane %v1095, 7
    %1242 = vrot.lane.b32.xlu0 %v1192, 64
    %v1243 = vpop.permute.xlu0 %1242
    %1244 = vrot.lane.b32.xlu0 %v1193, 64
    %v1245 = vpop.permute.xlu0 %1244
    %v1248 = vsel %vm1069, %v1094, 0
    %1250 = vmatpush.msra.mxu0 0.0
    %1251 = vmatpush.msra.mxu0 0.0
    %1252 = vmatpush.msra.mxu0 0.0
    %1253 = vmatpush.msra.mxu0 0.0
    %1254 = vmatpush.msra.mxu0 0.0
    %1255 = vmatpush.msra.mxu0 0.0
    %1256 = vmatpush.msra.mxu0 0.0
    %1257 = vmatpush.msra.mxu0 0.0
    %1258 = vmatpush.msra.mxu0 0.0
    %1259 = vmatpush.msra.mxu0 0.0
    %1260 = vmatpush.msra.mxu0 0.0
    %1261 = vmatpush.msra.mxu0 0.0
    %1262 = vmatpush.msra.mxu0 0.0
    %1263 = vmatpush.msra.mxu0 0.0
    %1264 = vmatpush.msra.mxu0 %v1245
    %1265 = vmatpush.msra.mxu0 %v1243
    %1266 = vmatmul.f32.gmra.mxu0 %v1248
    %v1267 = vpop.f32.mrf.mxu0
    %v1268 = vadd.f32 0.0, %v1267
    %1269 = vdwg.mxu0
    %1272 = vrot.lane.b32.xlu0 %v1194, 64
    %v1273 = vpop.permute.xlu0 %1272
    %1274 = vrot.lane.b32.xlu0 %v1195, 64
    %v1275 = vpop.permute.xlu0 %1274
    %v1278 = vsel %vm1069, %v1226, 0
    %1280 = vmatpush.msra.mxu0 0.0
    %1281 = vmatpush.msra.mxu0 0.0
    %1282 = vmatpush.msra.mxu0 0.0
    %1283 = vmatpush.msra.mxu0 0.0
    %1284 = vmatpush.msra.mxu0 0.0
    %1285 = vmatpush.msra.mxu0 0.0
    %1286 = vmatpush.msra.mxu0 0.0
    %1287 = vmatpush.msra.mxu0 0.0
    %1288 = vmatpush.msra.mxu0 0.0
    %1289 = vmatpush.msra.mxu0 0.0
    %1290 = vmatpush.msra.mxu0 0.0
    %1291 = vmatpush.msra.mxu0 0.0
    %1292 = vmatpush.msra.mxu0 0.0
    %1293 = vmatpush.msra.mxu0 0.0
    %1294 = vmatpush.msra.mxu0 %v1275
    %1295 = vmatpush.msra.mxu0 %v1273
    %1296 = vmatmul.f32.gmra.mxu0 %v1278
    %v1297 = vpop.f32.mrf.mxu0
    %v1298 = vadd.f32 0.0, %v1297
    %1299 = vdwg.mxu0
    %1302 = vrot.lane.b32.xlu0 %v1196, 64
    %v1303 = vpop.permute.xlu0 %1302
    %1304 = vrot.lane.b32.xlu0 %v1197, 64
    %v1305 = vpop.permute.xlu0 %1304
    %v1308 = vsel %vm1069, %v1227, 0
    %1310 = vmatpush.msra.mxu0 0.0
    %1311 = vmatpush.msra.mxu0 0.0
    %1312 = vmatpush.msra.mxu0 0.0
    %1313 = vmatpush.msra.mxu0 0.0
    %1314 = vmatpush.msra.mxu0 0.0
    %1315 = vmatpush.msra.mxu0 0.0
    %1316 = vmatpush.msra.mxu0 0.0
    %1317 = vmatpush.msra.mxu0 0.0
    %1318 = vmatpush.msra.mxu0 0.0
    %1319 = vmatpush.msra.mxu0 0.0
    %1320 = vmatpush.msra.mxu0 0.0
    %1321 = vmatpush.msra.mxu0 0.0
    %1322 = vmatpush.msra.mxu0 0.0
    %1323 = vmatpush.msra.mxu0 0.0
    %1324 = vmatpush.msra.mxu0 %v1305
    %1325 = vmatpush.msra.mxu0 %v1303
    %1326 = vmatmul.f32.gmra.mxu0 %v1308
    %v1327 = vpop.f32.mrf.mxu0
    %v1328 = vadd.f32 0.0, %v1327
    %1329 = vdwg.mxu0
    %1332 = vrot.lane.b32.xlu0 %v1198, 64
    %v1333 = vpop.permute.xlu0 %1332
    %1334 = vrot.lane.b32.xlu0 %v1199, 64
    %v1335 = vpop.permute.xlu0 %1334
    %v1338 = vsel %vm1069, %v1228, 0
    %1340 = vmatpush.msra.mxu0 0.0
    %1341 = vmatpush.msra.mxu0 0.0
    %1342 = vmatpush.msra.mxu0 0.0
    %1343 = vmatpush.msra.mxu0 0.0
    %1344 = vmatpush.msra.mxu0 0.0
    %1345 = vmatpush.msra.mxu0 0.0
    %1346 = vmatpush.msra.mxu0 0.0
    %1347 = vmatpush.msra.mxu0 0.0
    %1348 = vmatpush.msra.mxu0 0.0
    %1349 = vmatpush.msra.mxu0 0.0
    %1350 = vmatpush.msra.mxu0 0.0
    %1351 = vmatpush.msra.mxu0 0.0
    %1352 = vmatpush.msra.mxu0 0.0
    %1353 = vmatpush.msra.mxu0 0.0
    %1354 = vmatpush.msra.mxu0 %v1335
    %1355 = vmatpush.msra.mxu0 %v1333
    %1356 = vmatmul.f32.gmra.mxu0 %v1338
    %v1357 = vpop.f32.mrf.mxu0
    %v1358 = vadd.f32 0.0, %v1357
    %1359 = vdwg.mxu0
    %1362 = vrot.lane.b32.xlu0 %v1200, 64
    %v1363 = vpop.permute.xlu0 %1362
    %1364 = vrot.lane.b32.xlu0 %v1201, 64
    %v1365 = vpop.permute.xlu0 %1364
    %v1368 = vsel %vm1069, %v1229, 0
    %1370 = vmatpush.msra.mxu0 0.0
    %1371 = vmatpush.msra.mxu0 0.0
    %1372 = vmatpush.msra.mxu0 0.0
    %1373 = vmatpush.msra.mxu0 0.0
    %1374 = vmatpush.msra.mxu0 0.0
    %1375 = vmatpush.msra.mxu0 0.0
    %1376 = vmatpush.msra.mxu0 0.0
    %1377 = vmatpush.msra.mxu0 0.0
    %1378 = vmatpush.msra.mxu0 0.0
    %1379 = vmatpush.msra.mxu0 0.0
    %1380 = vmatpush.msra.mxu0 0.0
    %1381 = vmatpush.msra.mxu0 0.0
    %1382 = vmatpush.msra.mxu0 0.0
    %1383 = vmatpush.msra.mxu0 0.0
    %1384 = vmatpush.msra.mxu0 %v1365
    %1385 = vmatpush.msra.mxu0 %v1363
    %1386 = vmatmul.f32.gmra.mxu0 %v1368
    %v1387 = vpop.f32.mrf.mxu0
    %v1388 = vadd.f32 0.0, %v1387
    %1389 = vdwg.mxu0
    %1392 = vrot.lane.b32.xlu0 %v1202, 64
    %v1393 = vpop.permute.xlu0 %1392
    %1394 = vrot.lane.b32.xlu0 %v1203, 64
    %v1395 = vpop.permute.xlu0 %1394
    %v1398 = vsel %vm1069, %v1230, 0
    %1400 = vmatpush.msra.mxu0 0.0
    %1401 = vmatpush.msra.mxu0 0.0
    %1402 = vmatpush.msra.mxu0 0.0
    %1403 = vmatpush.msra.mxu0 0.0
    %1404 = vmatpush.msra.mxu0 0.0
    %1405 = vmatpush.msra.mxu0 0.0
    %1406 = vmatpush.msra.mxu0 0.0
    %1407 = vmatpush.msra.mxu0 0.0
    %1408 = vmatpush.msra.mxu0 0.0
    %1409 = vmatpush.msra.mxu0 0.0
    %1410 = vmatpush.msra.mxu0 0.0
    %1411 = vmatpush.msra.mxu0 0.0
    %1412 = vmatpush.msra.mxu0 0.0
    %1413 = vmatpush.msra.mxu0 0.0
    %1414 = vmatpush.msra.mxu0 %v1395
    %1415 = vmatpush.msra.mxu0 %v1393
    %1416 = vmatmul.f32.gmra.mxu0 %v1398
    %v1417 = vpop.f32.mrf.mxu0
    %v1418 = vadd.f32 0.0, %v1417
    %1419 = vdwg.mxu0
    %1422 = vrot.lane.b32.xlu0 %v1204, 64
    %v1423 = vpop.permute.xlu0 %1422
    %1424 = vrot.lane.b32.xlu0 %v1205, 64
    %v1425 = vpop.permute.xlu0 %1424
    %v1428 = vsel %vm1069, %v1231, 0
    %1430 = vmatpush.msra.mxu0 0.0
    %1431 = vmatpush.msra.mxu0 0.0
    %1432 = vmatpush.msra.mxu0 0.0
    %1433 = vmatpush.msra.mxu0 0.0
    %1434 = vmatpush.msra.mxu0 0.0
    %1435 = vmatpush.msra.mxu0 0.0
    %1436 = vmatpush.msra.mxu0 0.0
    %1437 = vmatpush.msra.mxu0 0.0
    %1438 = vmatpush.msra.mxu0 0.0
    %1439 = vmatpush.msra.mxu0 0.0
    %1440 = vmatpush.msra.mxu0 0.0
    %1441 = vmatpush.msra.mxu0 0.0
    %1442 = vmatpush.msra.mxu0 0.0
    %1443 = vmatpush.msra.mxu0 0.0
    %1444 = vmatpush.msra.mxu0 %v1425
    %1445 = vmatpush.msra.mxu0 %v1423
    %1446 = vmatmul.f32.gmra.mxu0 %v1428
    %v1447 = vpop.f32.mrf.mxu0
    %v1448 = vadd.f32 0.0, %v1447
    %1449 = vdwg.mxu0
    %1452 = vrot.lane.b32.xlu0 %v1206, 64
    %v1453 = vpop.permute.xlu0 %1452
    %1454 = vrot.lane.b32.xlu0 %v1207, 64
    %v1455 = vpop.permute.xlu0 %1454
    %v1458 = vsel %vm1069, %v1232, 0
    %1460 = vmatpush.msra.mxu0 0.0
    %1461 = vmatpush.msra.mxu0 0.0
    %1462 = vmatpush.msra.mxu0 0.0
    %1463 = vmatpush.msra.mxu0 0.0
    %1464 = vmatpush.msra.mxu0 0.0
    %1465 = vmatpush.msra.mxu0 0.0
    %1466 = vmatpush.msra.mxu0 0.0
    %1467 = vmatpush.msra.mxu0 0.0
    %1468 = vmatpush.msra.mxu0 0.0
    %1469 = vmatpush.msra.mxu0 0.0
    %1470 = vmatpush.msra.mxu0 0.0
    %1471 = vmatpush.msra.mxu0 0.0
    %1472 = vmatpush.msra.mxu0 0.0
    %1473 = vmatpush.msra.mxu0 0.0
    %1474 = vmatpush.msra.mxu0 %v1455
    %1475 = vmatpush.msra.mxu0 %v1453
    %1476 = vmatmul.f32.gmra.mxu0 %v1458
    %v1477 = vpop.f32.mrf.mxu0
    %v1478 = vadd.f32 0.0, %v1477
    %1479 = vdwg.mxu0
    %1482 = vrot.lane.b32.xlu0 %v1208, 64
    %v1483 = vpop.permute.xlu0 %1482
    %1484 = vrot.lane.b32.xlu0 %v1209, 64
    %v1485 = vpop.permute.xlu0 %1484
    %v1488 = vsel %vm1069, %v1095, 0
    %1490 = vmatpush.msra.mxu0 0.0
    %1491 = vmatpush.msra.mxu0 0.0
    %1492 = vmatpush.msra.mxu0 0.0
    %1493 = vmatpush.msra.mxu0 0.0
    %1494 = vmatpush.msra.mxu0 0.0
    %1495 = vmatpush.msra.mxu0 0.0
    %1496 = vmatpush.msra.mxu0 0.0
    %1497 = vmatpush.msra.mxu0 0.0
    %1498 = vmatpush.msra.mxu0 0.0
    %1499 = vmatpush.msra.mxu0 0.0
    %1500 = vmatpush.msra.mxu0 0.0
    %1501 = vmatpush.msra.mxu0 0.0
    %1502 = vmatpush.msra.mxu0 0.0
    %1503 = vmatpush.msra.mxu0 0.0
    %1504 = vmatpush.msra.mxu0 %v1485
    %1505 = vmatpush.msra.mxu0 %v1483
    %1506 = vmatmul.f32.gmra.mxu0 %v1488
    %v1507 = vpop.f32.mrf.mxu0
    %v1508 = vadd.f32 0.0, %v1507
    %1509 = vdwg.mxu0
    %1512 = vrot.lane.b32.xlu0 %v1210, 64
    %v1513 = vpop.permute.xlu0 %1512
    %1514 = vrot.lane.b32.xlu0 %v1211, 64
    %v1515 = vpop.permute.xlu0 %1514
    %v1518 = vsel %vm1069, %v1233, 0
    %1520 = vmatpush.msra.mxu0 0.0
    %1521 = vmatpush.msra.mxu0 0.0
    %1522 = vmatpush.msra.mxu0 0.0
    %1523 = vmatpush.msra.mxu0 0.0
    %1524 = vmatpush.msra.mxu0 0.0
    %1525 = vmatpush.msra.mxu0 0.0
    %1526 = vmatpush.msra.mxu0 0.0
    %1527 = vmatpush.msra.mxu0 0.0
    %1528 = vmatpush.msra.mxu0 0.0
    %1529 = vmatpush.msra.mxu0 0.0
    %1530 = vmatpush.msra.mxu0 0.0
    %1531 = vmatpush.msra.mxu0 0.0
    %1532 = vmatpush.msra.mxu0 0.0
    %1533 = vmatpush.msra.mxu0 0.0
    %1534 = vmatpush.msra.mxu0 %v1515
    %1535 = vmatpush.msra.mxu0 %v1513
    %1536 = vmatmul.f32.gmra.mxu0 %v1518
    %v1537 = vpop.f32.mrf.mxu0
    %v1538 = vadd.f32 0.0, %v1537
    %1539 = vdwg.mxu0
    %1542 = vrot.lane.b32.xlu0 %v1212, 64
    %v1543 = vpop.permute.xlu0 %1542
    %1544 = vrot.lane.b32.xlu0 %v1213, 64
    %v1545 = vpop.permute.xlu0 %1544
    %v1548 = vsel %vm1069, %v1234, 0
    %1550 = vmatpush.msra.mxu0 0.0
    %1551 = vmatpush.msra.mxu0 0.0
    %1552 = vmatpush.msra.mxu0 0.0
    %1553 = vmatpush.msra.mxu0 0.0
    %1554 = vmatpush.msra.mxu0 0.0
    %1555 = vmatpush.msra.mxu0 0.0
    %1556 = vmatpush.msra.mxu0 0.0
    %1557 = vmatpush.msra.mxu0 0.0
    %1558 = vmatpush.msra.mxu0 0.0
    %1559 = vmatpush.msra.mxu0 0.0
    %1560 = vmatpush.msra.mxu0 0.0
    %1561 = vmatpush.msra.mxu0 0.0
    %1562 = vmatpush.msra.mxu0 0.0
    %1563 = vmatpush.msra.mxu0 0.0
    %1564 = vmatpush.msra.mxu0 %v1545
    %1565 = vmatpush.msra.mxu0 %v1543
    %1566 = vmatmul.f32.gmra.mxu0 %v1548
    %v1567 = vpop.f32.mrf.mxu0
    %v1568 = vadd.f32 0.0, %v1567
    %1569 = vdwg.mxu0
    %1572 = vrot.lane.b32.xlu0 %v1214, 64
    %v1573 = vpop.permute.xlu0 %1572
    %1574 = vrot.lane.b32.xlu0 %v1215, 64
    %v1575 = vpop.permute.xlu0 %1574
    %v1578 = vsel %vm1069, %v1235, 0
    %1580 = vmatpush.msra.mxu0 0.0
    %1581 = vmatpush.msra.mxu0 0.0
    %1582 = vmatpush.msra.mxu0 0.0
    %1583 = vmatpush.msra.mxu0 0.0
    %1584 = vmatpush.msra.mxu0 0.0
    %1585 = vmatpush.msra.mxu0 0.0
    %1586 = vmatpush.msra.mxu0 0.0
    %1587 = vmatpush.msra.mxu0 0.0
    %1588 = vmatpush.msra.mxu0 0.0
    %1589 = vmatpush.msra.mxu0 0.0
    %1590 = vmatpush.msra.mxu0 0.0
    %1591 = vmatpush.msra.mxu0 0.0
    %1592 = vmatpush.msra.mxu0 0.0
    %1593 = vmatpush.msra.mxu0 0.0
    %1594 = vmatpush.msra.mxu0 %v1575
    %1595 = vmatpush.msra.mxu0 %v1573
    %1596 = vmatmul.f32.gmra.mxu0 %v1578
    %v1597 = vpop.f32.mrf.mxu0
    %v1598 = vadd.f32 0.0, %v1597
    %1599 = vdwg.mxu0
    %1602 = vrot.lane.b32.xlu0 %v1216, 64
    %v1603 = vpop.permute.xlu0 %1602
    %1604 = vrot.lane.b32.xlu0 %v1217, 64
    %v1605 = vpop.permute.xlu0 %1604
    %v1608 = vsel %vm1069, %v1236, 0
    %1610 = vmatpush.msra.mxu0 0.0
    %1611 = vmatpush.msra.mxu0 0.0
    %1612 = vmatpush.msra.mxu0 0.0
    %1613 = vmatpush.msra.mxu0 0.0
    %1614 = vmatpush.msra.mxu0 0.0
    %1615 = vmatpush.msra.mxu0 0.0
    %1616 = vmatpush.msra.mxu0 0.0
    %1617 = vmatpush.msra.mxu0 0.0
    %1618 = vmatpush.msra.mxu0 0.0
    %1619 = vmatpush.msra.mxu0 0.0
    %1620 = vmatpush.msra.mxu0 0.0
    %1621 = vmatpush.msra.mxu0 0.0
    %1622 = vmatpush.msra.mxu0 0.0
    %1623 = vmatpush.msra.mxu0 0.0
    %1624 = vmatpush.msra.mxu0 %v1605
    %1625 = vmatpush.msra.mxu0 %v1603
    %1626 = vmatmul.f32.gmra.mxu0 %v1608
    %v1627 = vpop.f32.mrf.mxu0
    %v1628 = vadd.f32 0.0, %v1627
    %1629 = vdwg.mxu0
    %1632 = vrot.lane.b32.xlu0 %v1218, 64
    %v1633 = vpop.permute.xlu0 %1632
    %1634 = vrot.lane.b32.xlu0 %v1219, 64
    %v1635 = vpop.permute.xlu0 %1634
    %v1638 = vsel %vm1069, %v1237, 0
    %1640 = vmatpush.msra.mxu0 0.0
    %1641 = vmatpush.msra.mxu0 0.0
    %1642 = vmatpush.msra.mxu0 0.0
    %1643 = vmatpush.msra.mxu0 0.0
    %1644 = vmatpush.msra.mxu0 0.0
    %1645 = vmatpush.msra.mxu0 0.0
    %1646 = vmatpush.msra.mxu0 0.0
    %1647 = vmatpush.msra.mxu0 0.0
    %1648 = vmatpush.msra.mxu0 0.0
    %1649 = vmatpush.msra.mxu0 0.0
    %1650 = vmatpush.msra.mxu0 0.0
    %1651 = vmatpush.msra.mxu0 0.0
    %1652 = vmatpush.msra.mxu0 0.0
    %1653 = vmatpush.msra.mxu0 0.0
    %1654 = vmatpush.msra.mxu0 %v1635
    %1655 = vmatpush.msra.mxu0 %v1633
    %1656 = vmatmul.f32.gmra.mxu0 %v1638
    %v1657 = vpop.f32.mrf.mxu0
    %v1658 = vadd.f32 0.0, %v1657
    %1659 = vdwg.mxu0
    %1662 = vrot.lane.b32.xlu0 %v1220, 64
    %v1663 = vpop.permute.xlu0 %1662
    %1664 = vrot.lane.b32.xlu0 %v1221, 64
    %v1665 = vpop.permute.xlu0 %1664
    %v1668 = vsel %vm1069, %v1238, 0
    %1670 = vmatpush.msra.mxu0 0.0
    %1671 = vmatpush.msra.mxu0 0.0
    %1672 = vmatpush.msra.mxu0 0.0
    %1673 = vmatpush.msra.mxu0 0.0
    %1674 = vmatpush.msra.mxu0 0.0
    %1675 = vmatpush.msra.mxu0 0.0
    %1676 = vmatpush.msra.mxu0 0.0
    %1677 = vmatpush.msra.mxu0 0.0
    %1678 = vmatpush.msra.mxu0 0.0
    %1679 = vmatpush.msra.mxu0 0.0
    %1680 = vmatpush.msra.mxu0 0.0
    %1681 = vmatpush.msra.mxu0 0.0
    %1682 = vmatpush.msra.mxu0 0.0
    %1683 = vmatpush.msra.mxu0 0.0
    %1684 = vmatpush.msra.mxu0 %v1665
    %1685 = vmatpush.msra.mxu0 %v1663
    %1686 = vmatmul.f32.gmra.mxu0 %v1668
    %v1687 = vpop.f32.mrf.mxu0
    %v1688 = vadd.f32 0.0, %v1687
    %1689 = vdwg.mxu0
    %1692 = vrot.lane.b32.xlu0 %v1222, 64
    %v1693 = vpop.permute.xlu0 %1692
    %1694 = vrot.lane.b32.xlu0 %v1223, 64
    %v1695 = vpop.permute.xlu0 %1694
    %v1698 = vsel %vm1069, %v1239, 0
    %1700 = vmatpush.msra.mxu0 0.0
    %1701 = vmatpush.msra.mxu0 0.0
    %1702 = vmatpush.msra.mxu0 0.0
    %1703 = vmatpush.msra.mxu0 0.0
    %1704 = vmatpush.msra.mxu0 0.0
    %1705 = vmatpush.msra.mxu0 0.0
    %1706 = vmatpush.msra.mxu0 0.0
    %1707 = vmatpush.msra.mxu0 0.0
    %1708 = vmatpush.msra.mxu0 0.0
    %1709 = vmatpush.msra.mxu0 0.0
    %1710 = vmatpush.msra.mxu0 0.0
    %1711 = vmatpush.msra.mxu0 0.0
    %1712 = vmatpush.msra.mxu0 0.0
    %1713 = vmatpush.msra.mxu0 0.0
    %1714 = vmatpush.msra.mxu0 %v1695
    %1715 = vmatpush.msra.mxu0 %v1693
    %1716 = vmatmul.f32.gmra.mxu0 %v1698
    %v1717 = vpop.f32.mrf.mxu0
    %v1718 = vadd.f32 0.0, %v1717
    %1719 = vdwg.mxu0
    %v1720 = vld [vmem:[%s5] sm:$0x3]
    %v1721 = vperm.slane %v1720, 0
    %1723 = vrot.lane.b32.xlu0 %v1721, 96
    %v1724 = vpop.permute.xlu0 %1723
    %v1726 = vmul.f32 %v58, %v1724
    %v1727 = vmul.f32 %v61, %v1724
    %v1728 = vperm.slane %v1720, 1
    %v1729 = vmul.f32 %v1268, %v1728
    %v1730 = vmul.f32 %v1298, %v1728
    %v1731 = vmul.f32 %v1328, %v1728
    %v1732 = vmul.f32 %v1358, %v1728
    %v1733 = vmul.f32 %v1388, %v1728
    %v1734 = vmul.f32 %v1418, %v1728
    %v1735 = vmul.f32 %v1448, %v1728
    %v1736 = vmul.f32 %v1478, %v1728
    %v1737 = vmul.f32 %v1508, %v1728
    %v1738 = vmul.f32 %v1538, %v1728
    %v1739 = vmul.f32 %v1568, %v1728
    %v1740 = vmul.f32 %v1598, %v1728
    %v1741 = vmul.f32 %v1628, %v1728
    %v1742 = vmul.f32 %v1658, %v1728
    %v1743 = vmul.f32 %v1688, %v1728
    %v1744 = vmul.f32 %v1718, %v1728
    %v1761 = vrot.slane %v1730, 7
    %v1762 = vsel %vm1031, %v1761, %v1729
    %v1763 = vrot.slane %v1731, 6
    %v1764 = vsel %vm1034, %v1763, %v1762
    %v1765 = vrot.slane %v1732, 5
    %v1766 = vsel %vm1037, %v1765, %v1764
    %v1767 = vrot.slane %v1733, 4
    %v1768 = vsel %vm1040, %v1767, %v1766
    %v1769 = vrot.slane %v1734, 3
    %v1770 = vsel %vm1043, %v1769, %v1768
    %v1771 = vrot.slane %v1735, 2
    %v1772 = vsel %vm1046, %v1771, %v1770
    %v1773 = vrot.slane %v1736, 1
    %v1774 = vsel %vm1049, %v1773, %v1772
    %v1775 = vrot.slane %v1738, 7
    %v1776 = vsel %vm1031, %v1775, %v1737
    %v1777 = vrot.slane %v1739, 6
    %v1778 = vsel %vm1034, %v1777, %v1776
    %v1779 = vrot.slane %v1740, 5
    %v1780 = vsel %vm1037, %v1779, %v1778
    %v1781 = vrot.slane %v1741, 4
    %v1782 = vsel %vm1040, %v1781, %v1780
    %v1783 = vrot.slane %v1742, 3
    %v1784 = vsel %vm1043, %v1783, %v1782
    %v1785 = vrot.slane %v1743, 2
    %v1786 = vsel %vm1046, %v1785, %v1784
    %v1787 = vrot.slane %v1744, 1
    %v1788 = vsel %vm1049, %v1787, %v1786
    %1789 = vrot.lane.b32.xlu0 %v1774, 96
    %v1790 = vpop.permute.xlu0 %1789
    %1791 = vrot.lane.b32.xlu0 %v1788, 96
    %v1792 = vpop.permute.xlu0 %1791
    %v1795 = vadd.f32 %v1726, %v1790
    %v1796 = vadd.f32 %v1727, %v1792
    %1799 = vrot.lane.b32.xlu0 %v1795, 32
    %v1800 = vpop.permute.xlu0 %1799
    %1801 = vrot.lane.b32.xlu0 %v1796, 32
    %v1802 = vpop.permute.xlu0 %1801
    %v1805 = vsel %vm33, %v1800, 0.0
    %1806 = vadd.xlane.f32.xlu0 %v1805
    %v1807 = vpop.xlane.xlu0 %1806
    %v1808 = vsel %vm33, %v1802, 0.0
    %1809 = vadd.xlane.f32.xlu0 %v1808
    %v1810 = vpop.xlane.xlu0 %1809
    %v1811 = vxor.u32 %v1807, 2147483648
    %v1812 = vxor.u32 %v1810, 2147483648
    %v1813 = vmul.f32 %v1811, 1.442695
    %v1814 = vpow.pop %v1813
    %v1815 = vmul.f32 %v1812, 1.442695
    %v1816 = vpow.pop %v1815
    %v1817 = vadd.f32 %v1814, 1.0
    %v1818 = vadd.f32 %v1816, 1.0
    %v1819 = vrcp.pop %v1817
    %v1820 = vmul.f32 %v1817, %v1819
    %v1821 = vsub.f32 1.0, %v1820
    %v1822 = vmul.f32 %v1819, %v1821
    %v1823 = vadd.f32 %v1819, %v1822
    %vm1824 = vweird.f32 %v1817
    %vm1825 = vweird.f32 %v1819
    %vm1826 = vmor %vm1824, %vm1825
    %v1827 = vsel %vm1826, %v1819, %v1823
    %v1828 = vand.u32 2147483647, %v1817
    %vm1829 = vcmp.eq.f32.partialorder %v1828, 8.507059e+37
    %v1830 = vand.u32 %v1817, 2147483648
    %v1831 = vor.u32 1.1754944e-38, %v1830
    %v1832 = vsel %vm1829, %v1831, %v1827
    %v1833 = vmul.f32 1.0, %v1832
    %v1834 = vrcp.pop %v1818
    %v1835 = vmul.f32 %v1818, %v1834
    %v1836 = vsub.f32 1.0, %v1835
    %v1837 = vmul.f32 %v1834, %v1836
    %v1838 = vadd.f32 %v1834, %v1837
    %vm1839 = vweird.f32 %v1818
    %vm1840 = vweird.f32 %v1834
    %vm1841 = vmor %vm1839, %vm1840
    %v1842 = vsel %vm1841, %v1834, %v1838
    %v1843 = vand.u32 2147483647, %v1818
    %vm1844 = vcmp.eq.f32.partialorder %v1843, 8.507059e+37
    %v1845 = vand.u32 %v1818, 2147483648
    %v1846 = vor.u32 1.1754944e-38, %v1845
    %v1847 = vsel %vm1844, %v1846, %v1842
    %v1848 = vmul.f32 1.0, %v1847
    %v1849 = vmul.f32 %v1833, %v58
    %v1850 = vmul.f32 %v1848, %v61
    %v1851 = vsub.f32 1.0, %v1833
    %v1852 = vsub.f32 1.0, %v1848
    %v1869 = vrot.slane %v1298, 7
    %v1870 = vsel %vm1031, %v1869, %v1268
    %v1871 = vrot.slane %v1328, 6
    %v1872 = vsel %vm1034, %v1871, %v1870
    %v1873 = vrot.slane %v1358, 5
    %v1874 = vsel %vm1037, %v1873, %v1872
    %v1875 = vrot.slane %v1388, 4
    %v1876 = vsel %vm1040, %v1875, %v1874
    %v1877 = vrot.slane %v1418, 3
    %v1878 = vsel %vm1043, %v1877, %v1876
    %v1879 = vrot.slane %v1448, 2
    %v1880 = vsel %vm1046, %v1879, %v1878
    %v1881 = vrot.slane %v1478, 1
    %v1882 = vsel %vm1049, %v1881, %v1880
    %v1883 = vrot.slane %v1538, 7
    %v1884 = vsel %vm1031, %v1883, %v1508
    %v1885 = vrot.slane %v1568, 6
    %v1886 = vsel %vm1034, %v1885, %v1884
    %v1887 = vrot.slane %v1598, 5
    %v1888 = vsel %vm1037, %v1887, %v1886
    %v1889 = vrot.slane %v1628, 4
    %v1890 = vsel %vm1040, %v1889, %v1888
    %v1891 = vrot.slane %v1658, 3
    %v1892 = vsel %vm1043, %v1891, %v1890
    %v1893 = vrot.slane %v1688, 2
    %v1894 = vsel %vm1046, %v1893, %v1892
    %v1895 = vrot.slane %v1718, 1
    %v1896 = vsel %vm1049, %v1895, %v1894
    %v1899 = vmul.f32 %v1851, %v1882
    %v1900 = vmul.f32 %v1852, %v1896
    %1903 = vrot.lane.b32.xlu0 %v1899, 96
    %v1904 = vpop.permute.xlu0 %1903
    %1905 = vrot.lane.b32.xlu0 %v1900, 96
    %v1906 = vpop.permute.xlu0 %1905
    %v1909 = vadd.f32 %v1849, %v1904
    %v1910 = vadd.f32 %v1850, %v1906
    %1911 = vrot.lane.b32.xlu0 %v27, 96
    %v1912 = vpop.permute.xlu0 %1911
    %1913 = vrot.lane.b32.xlu0 %v28, 96
    %v1914 = vpop.permute.xlu0 %1913
    %v1917 = vadd.f32 %v1909, %v1912
    %v1918 = vadd.f32 %v1910, %v1914
    %v1919 = vld [vmem:[%s6] sm:$0xf]
    %1922 = vrot.lane.b32.xlu0 %v1917, 32
    %v1923 = vpop.permute.xlu0 %1922
    %1924 = vrot.lane.b32.xlu0 %v1918, 32
    %v1925 = vpop.permute.xlu0 %1924
    %v1929 = vsel %vm1069, %v1919, 0
    %1931 = vmatpush.msra.mxu0 0.0
    %1932 = vmatpush.msra.mxu0 0.0
    %1933 = vmatpush.msra.mxu0 0.0
    %1934 = vmatpush.msra.mxu0 0.0
    %1935 = vmatpush.msra.mxu0 0.0
    %1936 = vmatpush.msra.mxu0 0.0
    %1937 = vmatpush.msra.mxu0 0.0
    %1938 = vmatpush.msra.mxu0 0.0
    %1939 = vmatpush.msra.mxu0 0.0
    %1940 = vmatpush.msra.mxu0 0.0
    %1941 = vmatpush.msra.mxu0 0.0
    %1942 = vmatpush.msra.mxu0 0.0
    %1943 = vmatpush.msra.mxu0 0.0
    %1944 = vmatpush.msra.mxu0 0.0
    %1945 = vmatpush.msra.mxu0 %v1925
    %1946 = vmatpush.msra.mxu0 %v1923
    %1947 = vmatmul.f32.gmra.mxu0 %v1929
    %v1948 = vpop.f32.mrf.mxu0
    %v1949 = vadd.f32 0.0, %v1948
    %1950 = vdwg.mxu0
    %vm1951 = vcmask 257024
    %1952 = vst.msk [vmem:[#allocation2] sm:$0xf] %vm1951, %v1949
    // Predicated region
    $region30: #{tpu_custom_call.1} parent=1 // pred_check
      _
    $region31: #{tpu_custom_call.1} parent=1 // pred_check_branch
      %1954 = sbr.rel (0) target = $region33
    $region32: #{tpu_custom_call.1} parent=1 // pred_region
      %1956 = vsyncadd [#allocation3], 0
      %s1958 = sshll.u32 [#allocation2], 4
      %s1959 = int_to_ptr.vmem [resolvable:$true] %s1958
      %s1960 = sshll.u32 %s7, 4
      %s1961 = int_to_ptr.hbm [resolvable:$true] %s1960
      %1963 = dma.vmem_to_hbm [thread:$0]  %s1959, 64, %s1961, [#allocation3]
    $region33: #{tpu_custom_call.1} parent=1 // pred_fallthru
      _
    // Predicated region
    $region34: #{tpu_custom_call.1} parent=1 // pred_check
      _
    $region35: #{tpu_custom_call.1} parent=1 // pred_check_branch
      %1965 = sbr.rel (0) target = $region37
    $region36: #{tpu_custom_call.1} parent=1 // pred_region
      %1967 = dma.done [#allocation3], 64
    $region37: #{tpu_custom_call.1} parent=1 // pred_fallthru
      _
    %1968 = vsyncpa [#allocation3], 1

</llo_original>
